<compile_context>
chip_gen: v5e
topology: v5e:2x2
jax: 0.10.0
libtpu: 0.0.40
codegen_flags: <defaults>
</compile_context>

<pallas_src>
import functools

import jax
import jax.numpy as jnp
from jax.experimental import pallas as pl
from jax.experimental.pallas import tpu as pltpu

LEAKY_ALPHA = 0.33
BN_EPS = 1e-5
AUX_ROW_STRIDE = 8          # each layer's (bias, gamma, beta) group starts on a sublane boundary
DEFAULT_K_TILE = 512        # first-layer K tile (multiple of 128) used when in_features is large


def _round_up(x, m):
    return ((x + m - 1) // m) * m


def _fnn_kernel(widths, n_out_padded, x_ref, *refs):
    """grid = (num_k_tiles,) over the FIRST layer's contraction dimension.

    refs = (w_0, ..., w_{n_hidden}, aux, out, acc)
      w_0        : (tk, widths[0]) bf16 tile of the first-layer weight
      w_1..w_nh  : full bf16 weights (constant index_map -> DMA'd once)
      aux        : (8*(n_hidden+1), C) f32; layer i uses rows 8i, 8i+1, 8i+2
                   (bias, gamma, beta); row 8*n_hidden holds the output bias.
      out        : (batch, n_out_padded) f32, lane-dense (padded to 128 columns)
      acc        : VMEM scratch (batch, widths[0]) f32 first-layer accumulator
    """
    n_hidden = len(widths)
    w_refs = refs[: n_hidden + 1]
    aux_ref = refs[n_hidden + 1]
    out_ref = refs[n_hidden + 2]
    acc_ref = refs[n_hidden + 3]

    k = pl.program_id(0)

    @pl.when(k == 0)
    def _():
        acc_ref[...] = jnp.zeros_like(acc_ref)

    # First layer, K-tiled: bf16 MXU operands, f32 accumulation across grid steps.
    acc_ref[...] += jnp.dot(x_ref[...], w_refs[0][...],
                            preferred_element_type=jnp.float32)

    @pl.when(k == pl.num_programs(0) - 1)
    def _():
        aux = aux_ref[...]                      # one small load, sliced in-register
        h = acc_ref[...]
        for i, width in enumerate(widths):
            row = AUX_ROW_STRIDE * i
            b = aux[row + 0:row + 1, 0:width]
            gamma = aux[row + 1:row + 2, 0:width]
            beta = aux[row + 2:row + 3, 0:width]
            if i > 0:
                h = jnp.dot(h.astype(jnp.bfloat16), w_refs[i][...],
                            preferred_element_type=jnp.float32)
            h = h + b
            # LeakyReLU(negative_slope=0.33)
            h = jnp.maximum(h, LEAKY_ALPHA * h)
            # BatchNorm1d (train-mode batch stats), folded to one scale+shift.
            mean = jnp.mean(h, axis=0, keepdims=True)
            msq = jnp.mean(h * h, axis=0, keepdims=True)
            var = jnp.maximum(msq - mean * mean, 0.0)   # clamp f32 cancellation
            scale = gamma * jax.lax.rsqrt(var + BN_EPS)
            shift = beta - mean * scale
            h = h * scale + shift

        b_out = aux[AUX_ROW_STRIDE * n_hidden:AUX_ROW_STRIDE * n_hidden + 1,
                    0:n_out_padded]
        out_ref[...] = (
            jnp.dot(h.astype(jnp.bfloat16), w_refs[-1][...],
                    preferred_element_type=jnp.float32) + b_out
        )


def fnn_forward(x, weights, aux, widths, n_outputs, *, k_tile=DEFAULT_K_TILE):
    """x: (batch, in_features) f32. weights: n_hidden+1 bf16 (in, out) matrices.
    aux: packed f32 bias / BN-affine rows (8-row stride per layer)."""
    batch, in_features = x.shape
    n_hidden = len(widths)
    n_out_padded = _round_up(max(n_outputs, 1), 128)

    # --- first-layer K tiling (bounds VMEM for connectome-scale in_features) ---
    if in_features <= k_tile:
        tk = in_features
        k_padded = in_features
    else:
        tk = _round_up(k_tile, 128)
        k_padded = _round_up(in_features, tk)

    w0 = weights[0]
    if k_padded != in_features:
        x = jnp.pad(x, ((0, 0), (0, k_padded - in_features)))
        w0 = jnp.pad(w0, ((0, k_padded - in_features), (0, 0)))
    x = x.astype(jnp.bfloat16)                    # half the x DMA; MXU-native operand

    # --- lane-dense output: pad output weight to a multiple of 128 columns ---
    w_out = weights[-1]
    if w_out.shape[1] != n_out_padded:
        w_out = jnp.pad(w_out, ((0, 0), (0, n_out_padded - w_out.shape[1])))
    kernel_weights = [w0] + list(weights[1:-1]) + [w_out]

    num_k = k_padded // tk

    # Only x / w0 move with the K grid; everything else has a constant index_map
    # so Pallas skips re-DMA across grid steps.
    in_specs = [pl.BlockSpec((batch, tk), lambda kk: (0, kk)),
                pl.BlockSpec((tk, widths[0]), lambda kk: (kk, 0))]
    for w in kernel_weights[1:]:
        in_specs.append(pl.BlockSpec(w.shape, lambda kk: (0, 0)))
    in_specs.append(pl.BlockSpec(aux.shape, lambda kk: (0, 0)))
    out_spec = pl.BlockSpec((batch, n_out_padded), lambda kk: (0, 0))

    # Advisory cost estimate.
    dims = (in_features,) + tuple(widths) + (n_outputs,)
    flops = 2 * batch * sum(dims[i] * dims[i + 1] for i in range(len(dims) - 1))
    bytes_accessed = (
        x.size * x.dtype.itemsize
        + sum(int(w.size) * w.dtype.itemsize for w in kernel_weights)
        + aux.size * aux.dtype.itemsize
        + batch * n_out_padded * 4
    )

    # Generation-aware VMEM budget (v7x per-TC: 64 MiB; v5e/v6e: 128 MiB).
    buf_bytes = (
        2 * batch * tk * 2                         # x tile (bf16, double-buffered)
        + 2 * tk * widths[0] * 2                   # w0 tile (bf16, double-buffered)
        + sum(int(w.size) * 2 for w in kernel_weights[1:])
        + aux.size * 4
        + 2 * batch * n_out_padded * 4             # output slab
        + batch * widths[0] * 4                    # f32 accumulator scratch
    )
    try:
        vmem_cap = int(pltpu.get_tpu_info().vmem_capacity_bytes)
    except Exception:
        vmem_cap = 64 * 1024 * 1024                # conservative fallback (v7x per-TC)
    vmem_limit = min(int(vmem_cap * 0.9),
                     max(32 * 1024 * 1024, int(buf_bytes * 1.5) + (4 << 20)))

    out = pl.pallas_call(
        functools.partial(_fnn_kernel, tuple(widths), n_out_padded),
        out_shape=jax.ShapeDtypeStruct((batch, n_out_padded), jnp.float32),
        grid=(num_k,),
        in_specs=in_specs,
        out_specs=out_spec,
        scratch_shapes=[pltpu.VMEM((batch, widths[0]), jnp.float32)],
        cost_estimate=pl.CostEstimate(
            flops=flops,
            transcendentals=sum(widths),
            bytes_accessed=bytes_accessed,
        ),
        compiler_params=pltpu.CompilerParams(
            # Single K-reduction axis ("arbitrary"). The batch is intentionally NOT
            # tiled across a "parallel" axis: BatchNorm1d needs full-batch statistics.
            dimension_semantics=("arbitrary",),
            vmem_limit_bytes=vmem_limit,
        ),
    )(x, *kernel_weights, aux)
    return out[:, :n_outputs]


def _xavier_uniform(key, fan_in, fan_out):
    bound = (6.0 / (fan_in + fan_out)) ** 0.5
    return jax.random.uniform(
        key, (fan_in, fan_out), dtype=jnp.float32, minval=-bound, maxval=bound
    )


def make_fnn_params(key, in_features, layer_size=(256, 128, 64, 32), n_outputs=1):
    """Mirrors FNN._initialize_weights: Linear xavier_uniform weight / zero bias,
    BatchNorm1d weight=1 / bias=0. Weights are bf16 (MXU-native); each layer's
    (bias, gamma, beta) group starts on an 8-row sublane boundary of one f32 array."""
    widths = tuple(layer_size)
    dims = (in_features,) + widths
    keys = jax.random.split(key, len(widths) + 1)

    weights = []
    for i in range(len(widths)):
        weights.append(_xavier_uniform(keys[i], dims[i], dims[i + 1]).astype(jnp.bfloat16))
    weights.append(_xavier_uniform(keys[-1], dims[-1], n_outputs).astype(jnp.bfloat16))

    n_out_padded = _round_up(max(n_outputs, 1), 128)
    aux_cols = _round_up(max(max(widths), n_out_padded), 128)
    aux_rows = AUX_ROW_STRIDE * (len(widths) + 1)
    aux = jnp.zeros((aux_rows, aux_cols), jnp.float32)
    for i, w_i in enumerate(widths):
        aux = aux.at[AUX_ROW_STRIDE * i + 1, :w_i].set(1.0)   # BN gamma = 1
    return weights, aux, widths


def fnn_reference(x, weights, aux, widths, n_outputs):
    """Pure-JAX reference mirroring the PyTorch module (train-mode BN, two-pass
    variance), with the same bf16 matmul operands as the kernel."""
    n_hidden = len(widths)
    h = x.astype(jnp.float32)
    for i, width in enumerate(widths):
        w = weights[i]
        b = aux[AUX_ROW_STRIDE * i + 0, :width]
        gamma = aux[AUX_ROW_STRIDE * i + 1, :width]
        beta = aux[AUX_ROW_STRIDE * i + 2, :width]
        h = jnp.dot(h.astype(jnp.bfloat16), w, preferred_element_type=jnp.float32) + b
        h = jnp.where(h > 0, h, LEAKY_ALPHA * h)
        mean = jnp.mean(h, axis=0, keepdims=True)
        var = jnp.mean((h - mean) ** 2, axis=0, keepdims=True)
        h = (h - mean) * jax.lax.rsqrt(var + BN_EPS) * gamma + beta
    b_out = aux[AUX_ROW_STRIDE * n_hidden, :n_outputs]
    return jnp.dot(h.astype(jnp.bfloat16), weights[-1],
                   preferred_element_type=jnp.float32) + b_out


if __name__ == "__main__":
    key = jax.random.PRNGKey(0)
    k_x, k_p, k_a = jax.random.split(key, 3)

    batch = 128            # MXU row-aligned; BN statistics taken over the full batch
    in_features = 384
    layer_size = (256, 128, 64, 32)
    n_outputs = 1

    x = jax.random.normal(k_x, (batch, in_features), dtype=jnp.float32)
    weights, aux, widths = make_fnn_params(k_p, in_features, layer_size, n_outputs)
    # Perturb the packed bias / BN-affine rows so the correctness check exercises
    # every parameter slice (module init is 0/1; forward semantics unchanged).
    aux = aux + 0.05 * jax.random.normal(k_a, aux.shape, dtype=jnp.float32)

    # k_tile=128 forces the K-tiled first-layer path (grid=(3,)) at this small shape.
    out = fnn_forward(x, weights, aux, widths, n_outputs, k_tile=128)
    out = jax.block_until_ready(out)

    ref = fnn_reference(x, weights, aux, widths, n_outputs)
    assert out.shape == (batch, n_outputs), out.shape
    max_err = float(jnp.max(jnp.abs(out - ref)))
    assert jnp.allclose(out, ref, atol=2e-2, rtol=2e-2), max_err

    print("KERNEL_OK")
</pallas_src>

<mosaic_0001>
module attributes {stable_mosaic.version = 11 : i64} {
  func.func @_fnn_kernel(%arg0: i32, %arg1: memref<128x128xbf16, #tpu.memory_space<vmem>>, %arg2: memref<128x256xbf16, #tpu.memory_space<vmem>>, %arg3: memref<256x128xbf16, #tpu.memory_space<vmem>>, %arg4: memref<128x64xbf16, #tpu.memory_space<vmem>>, %arg5: memref<64x32xbf16, #tpu.memory_space<vmem>>, %arg6: memref<32x128xbf16, #tpu.memory_space<vmem>>, %arg7: memref<40x256xf32, #tpu.memory_space<vmem>>, %arg8: memref<128x128xf32, #tpu.memory_space<vmem>>, %arg9: memref<128x256xf32, #tpu.memory_space<vmem>>) attributes {dimension_semantics = [#tpu.dimension_semantics<arbitrary>], iteration_bounds = array<i64: 3>, scalar_prefetch = 0 : i64, scratch_operands = 1 : i64, tpu.core_type = #tpu.core_type<tc>, window_params = [{transform_indices = @transform_0, window_bounds = array<i64: 128, 128>}, {transform_indices = @transform_1, window_bounds = array<i64: 128, 256>}, {pipeline_mode = #tpu.pipeline_mode<synchronous>, transform_indices = @transform_2, window_bounds = array<i64: 256, 128>}, {pipeline_mode = #tpu.pipeline_mode<synchronous>, transform_indices = @transform_3, window_bounds = array<i64: 128, 64>}, {pipeline_mode = #tpu.pipeline_mode<synchronous>, transform_indices = @transform_4, window_bounds = array<i64: 64, 32>}, {pipeline_mode = #tpu.pipeline_mode<synchronous>, transform_indices = @transform_5, window_bounds = array<i64: 32, 128>}, {pipeline_mode = #tpu.pipeline_mode<synchronous>, transform_indices = @transform_6, window_bounds = array<i64: 40, 256>}, {pipeline_mode = #tpu.pipeline_mode<synchronous>, transform_indices = @transform_7, window_bounds = array<i64: 128, 128>}]} {
    %c0_i32 = arith.constant 0 : i32
    %0 = arith.cmpi eq, %arg0, %c0_i32 : i32
    %1 = arith.extui %0 : i1 to i32
    %c0_i32_0 = arith.constant 0 : i32
    %2 = arith.cmpi ne, %1, %c0_i32_0 : i32
    scf.if %2 {
      %cst_9 = arith.constant 0.000000e+00 : f32
      %12 = vector.broadcast %cst_9 : f32 to vector<128x256xf32>
      %c0_10 = arith.constant 0 : index
      %c0_11 = arith.constant 0 : index
      %13 = vector.load %arg9[%c0_10, %c0_11] : memref<128x256xf32, #tpu.memory_space<vmem>>, vector<128x256xf32>
      tpu.vector_store %arg9[%c0_10, %c0_11], %12 {strides = array<i32>} : memref<128x256xf32, #tpu.memory_space<vmem>>, vector<128x256xf32>,
    } else {
    }
    %c0 = arith.constant 0 : index
    %c0_1 = arith.constant 0 : index
    %3 = vector.load %arg9[%c0, %c0_1] : memref<128x256xf32, #tpu.memory_space<vmem>>, vector<128x256xf32>
    %c0_2 = arith.constant 0 : index
    %c0_3 = arith.constant 0 : index
    %4 = vector.load %arg1[%c0_2, %c0_3] : memref<128x128xbf16, #tpu.memory_space<vmem>>, vector<128x128xbf16>
    %c0_4 = arith.constant 0 : index
    %c0_5 = arith.constant 0 : index
    %5 = vector.load %arg2[%c0_4, %c0_5] : memref<128x256xbf16, #tpu.memory_space<vmem>>, vector<128x256xbf16>
    %cst = arith.constant dense<0.000000e+00> : vector<128x256xf32>
    %6 = tpu.matmul %4, %5, %cst {dimension_numbers = #tpu.dot_dimension_numbers<[1], [0], [0], [1], [0, 0, 1, 1], [], []>} : vector<128x128xbf16>, vector<128x256xbf16>, vector<128x256xf32> -> vector<128x256xf32>
    %7 = arith.addf %3, %6 : vector<128x256xf32>
    %c0_6 = arith.constant 0 : index
    %c0_7 = arith.constant 0 : index
    %8 = vector.load %arg9[%c0_6, %c0_7] : memref<128x256xf32, #tpu.memory_space<vmem>>, vector<128x256xf32>
    tpu.vector_store %arg9[%c0_6, %c0_7], %7 {strides = array<i32>} : memref<128x256xf32, #tpu.memory_space<vmem>>, vector<128x256xf32>,
    %c2_i32 = arith.constant 2 : i32
    %9 = arith.cmpi eq, %arg0, %c2_i32 : i32
    %10 = arith.extui %9 : i1 to i32
    %c0_i32_8 = arith.constant 0 : i32
    %11 = arith.cmpi ne, %10, %c0_i32_8 : i32
    scf.if %11 {
      %c0_9 = arith.constant 0 : index
      %c0_10 = arith.constant 0 : index
      %12 = vector.load %arg7[%c0_9, %c0_10] : memref<40x256xf32, #tpu.memory_space<vmem>>, vector<40x256xf32>
      %c0_11 = arith.constant 0 : index
      %c0_12 = arith.constant 0 : index
      %13 = vector.load %arg9[%c0_11, %c0_12] : memref<128x256xf32, #tpu.memory_space<vmem>>, vector<128x256xf32>
      %14 = vector.extract_strided_slice %12 {offsets = [0, 0], sizes = [1, 256], strides = [1, 1]} : vector<40x256xf32> to vector<1x256xf32>
      %15 = vector.extract_strided_slice %12 {offsets = [1, 0], sizes = [1, 256], strides = [1, 1]} : vector<40x256xf32> to vector<1x256xf32>
      %16 = vector.extract_strided_slice %12 {offsets = [2, 0], sizes = [1, 256], strides = [1, 1]} : vector<40x256xf32> to vector<1x256xf32>
      %17 = vector.broadcast %14 : vector<1x256xf32> to vector<128x256xf32>
      %18 = arith.addf %13, %17 : vector<128x256xf32>
      %cst_13 = arith.constant 3.300000e-01 : f32
      %19 = vector.broadcast %cst_13 : f32 to vector<128x256xf32>
      %20 = arith.mulf %19, %18 : vector<128x256xf32>
      %21 = arith.maximumf %18, %20 : vector<128x256xf32>
      %cst_14 = arith.constant dense<0.000000e+00> : vector<256xf32>
      %22 = vector.multi_reduction <add>, %21, %cst_14 [0] : vector<128x256xf32> to vector<256xf32>
      %23 = vector.shape_cast %22 : vector<256xf32> to vector<1x256xf32>
      %cst_15 = arith.constant 1.280000e+02 : f32
      %24 = vector.broadcast %cst_15 : f32 to vector<1x256xf32>
      %25 = arith.divf %23, %24 : vector<1x256xf32>
      %26 = arith.mulf %21, %21 : vector<128x256xf32>
      %cst_16 = arith.constant dense<0.000000e+00> : vector<256xf32>
      %27 = vector.multi_reduction <add>, %26, %cst_16 [0] : vector<128x256xf32> to vector<256xf32>
      %28 = vector.shape_cast %27 : vector<256xf32> to vector<1x256xf32>
      %cst_17 = arith.constant 1.280000e+02 : f32
      %29 = vector.broadcast %cst_17 : f32 to vector<1x256xf32>
      %30 = arith.divf %28, %29 : vector<1x256xf32>
      %31 = arith.mulf %25, %25 : vector<1x256xf32>
      %32 = arith.subf %30, %31 : vector<1x256xf32>
      %cst_18 = arith.constant 0.000000e+00 : f32
      %33 = vector.broadcast %cst_18 : f32 to vector<1x256xf32>
      %34 = arith.maximumf %32, %33 : vector<1x256xf32>
      %cst_19 = arith.constant 9.99999974E-6 : f32
      %35 = vector.broadcast %cst_19 : f32 to vector<1x256xf32>
      %36 = arith.addf %34, %35 : vector<1x256xf32>
      %37 = math.rsqrt %36 : vector<1x256xf32>
      %38 = arith.mulf %15, %37 : vector<1x256xf32>
      %39 = arith.mulf %25, %38 : vector<1x256xf32>
      %40 = arith.subf %16, %39 : vector<1x256xf32>
      %41 = vector.broadcast %38 : vector<1x256xf32> to vector<128x256xf32>
      %42 = arith.mulf %21, %41 : vector<128x256xf32>
      %43 = vector.broadcast %40 : vector<1x256xf32> to vector<128x256xf32>
      %44 = arith.addf %42, %43 : vector<128x256xf32>
      %45 = vector.extract_strided_slice %12 {offsets = [8, 0], sizes = [1, 128], strides = [1, 1]} : vector<40x256xf32> to vector<1x128xf32>
      %46 = vector.extract_strided_slice %12 {offsets = [9, 0], sizes = [1, 128], strides = [1, 1]} : vector<40x256xf32> to vector<1x128xf32>
      %47 = vector.extract_strided_slice %12 {offsets = [10, 0], sizes = [1, 128], strides = [1, 1]} : vector<40x256xf32> to vector<1x128xf32>
      %48 = arith.truncf %44 : vector<128x256xf32> to vector<128x256xbf16>
      %c0_20 = arith.constant 0 : index
      %c0_21 = arith.constant 0 : index
      %49 = vector.load %arg3[%c0_20, %c0_21] : memref<256x128xbf16, #tpu.memory_space<vmem>>, vector<256x128xbf16>
      %cst_22 = arith.constant dense<0.000000e+00> : vector<128x128xf32>
      %50 = tpu.matmul %48, %49, %cst_22 {dimension_numbers = #tpu.dot_dimension_numbers<[1], [0], [0], [1], [0, 0, 1, 1], [], []>} : vector<128x256xbf16>, vector<256x128xbf16>, vector<128x128xf32> -> vector<128x128xf32>
      %51 = vector.broadcast %45 : vector<1x128xf32> to vector<128x128xf32>
      %52 = arith.addf %50, %51 : vector<128x128xf32>
      %cst_23 = arith.constant 3.300000e-01 : f32
      %53 = vector.broadcast %cst_23 : f32 to vector<128x128xf32>
      %54 = arith.mulf %53, %52 : vector<128x128xf32>
      %55 = arith.maximumf %52, %54 : vector<128x128xf32>
      %cst_24 = arith.constant dense<0.000000e+00> : vector<128xf32>
      %56 = vector.multi_reduction <add>, %55, %cst_24 [0] : vector<128x128xf32> to vector<128xf32>
      %57 = vector.shape_cast %56 : vector<128xf32> to vector<1x128xf32>
      %cst_25 = arith.constant 1.280000e+02 : f32
      %58 = vector.broadcast %cst_25 : f32 to vector<1x128xf32>
      %59 = arith.divf %57, %58 : vector<1x128xf32>
      %60 = arith.mulf %55, %55 : vector<128x128xf32>
      %cst_26 = arith.constant dense<0.000000e+00> : vector<128xf32>
      %61 = vector.multi_reduction <add>, %60, %cst_26 [0] : vector<128x128xf32> to vector<128xf32>
      %62 = vector.shape_cast %61 : vector<128xf32> to vector<1x128xf32>
      %cst_27 = arith.constant 1.280000e+02 : f32
      %63 = vector.broadcast %cst_27 : f32 to vector<1x128xf32>
      %64 = arith.divf %62, %63 : vector<1x128xf32>
      %65 = arith.mulf %59, %59 : vector<1x128xf32>
      %66 = arith.subf %64, %65 : vector<1x128xf32>
      %cst_28 = arith.constant 0.000000e+00 : f32
      %67 = vector.broadcast %cst_28 : f32 to vector<1x128xf32>
      %68 = arith.maximumf %66, %67 : vector<1x128xf32>
      %cst_29 = arith.constant 9.99999974E-6 : f32
      %69 = vector.broadcast %cst_29 : f32 to vector<1x128xf32>
      %70 = arith.addf %68, %69 : vector<1x128xf32>
      %71 = math.rsqrt %70 : vector<1x128xf32>
      %72 = arith.mulf %46, %71 : vector<1x128xf32>
      %73 = arith.mulf %59, %72 : vector<1x128xf32>
      %74 = arith.subf %47, %73 : vector<1x128xf32>
      %75 = vector.broadcast %72 : vector<1x128xf32> to vector<128x128xf32>
      %76 = arith.mulf %55, %75 : vector<128x128xf32>
      %77 = vector.broadcast %74 : vector<1x128xf32> to vector<128x128xf32>
      %78 = arith.addf %76, %77 : vector<128x128xf32>
      %79 = vector.extract_strided_slice %12 {offsets = [16, 0], sizes = [1, 64], strides = [1, 1]} : vector<40x256xf32> to vector<1x64xf32>
      %80 = vector.extract_strided_slice %12 {offsets = [17, 0], sizes = [1, 64], strides = [1, 1]} : vector<40x256xf32> to vector<1x64xf32>
      %81 = vector.extract_strided_slice %12 {offsets = [18, 0], sizes = [1, 64], strides = [1, 1]} : vector<40x256xf32> to vector<1x64xf32>
      %82 = arith.truncf %78 : vector<128x128xf32> to vector<128x128xbf16>
      %c0_30 = arith.constant 0 : index
      %c0_31 = arith.constant 0 : index
      %83 = vector.load %arg4[%c0_30, %c0_31] : memref<128x64xbf16, #tpu.memory_space<vmem>>, vector<128x64xbf16>
      %cst_32 = arith.constant dense<0.000000e+00> : vector<128x64xf32>
      %84 = tpu.matmul %82, %83, %cst_32 {dimension_numbers = #tpu.dot_dimension_numbers<[1], [0], [0], [1], [0, 0, 1, 1], [], []>} : vector<128x128xbf16>, vector<128x64xbf16>, vector<128x64xf32> -> vector<128x64xf32>
      %85 = vector.broadcast %79 : vector<1x64xf32> to vector<128x64xf32>
      %86 = arith.addf %84, %85 : vector<128x64xf32>
      %cst_33 = arith.constant 3.300000e-01 : f32
      %87 = vector.broadcast %cst_33 : f32 to vector<128x64xf32>
      %88 = arith.mulf %87, %86 : vector<128x64xf32>
      %89 = arith.maximumf %86, %88 : vector<128x64xf32>
      %cst_34 = arith.constant dense<0.000000e+00> : vector<64xf32>
      %90 = vector.multi_reduction <add>, %89, %cst_34 [0] : vector<128x64xf32> to vector<64xf32>
      %91 = vector.shape_cast %90 : vector<64xf32> to vector<1x64xf32>
      %cst_35 = arith.constant 1.280000e+02 : f32
      %92 = vector.broadcast %cst_35 : f32 to vector<1x64xf32>
      %93 = arith.divf %91, %92 : vector<1x64xf32>
      %94 = arith.mulf %89, %89 : vector<128x64xf32>
      %cst_36 = arith.constant dense<0.000000e+00> : vector<64xf32>
      %95 = vector.multi_reduction <add>, %94, %cst_36 [0] : vector<128x64xf32> to vector<64xf32>
      %96 = vector.shape_cast %95 : vector<64xf32> to vector<1x64xf32>
      %cst_37 = arith.constant 1.280000e+02 : f32
      %97 = vector.broadcast %cst_37 : f32 to vector<1x64xf32>
      %98 = arith.divf %96, %97 : vector<1x64xf32>
      %99 = arith.mulf %93, %93 : vector<1x64xf32>
      %100 = arith.subf %98, %99 : vector<1x64xf32>
      %cst_38 = arith.constant 0.000000e+00 : f32
      %101 = vector.broadcast %cst_38 : f32 to vector<1x64xf32>
      %102 = arith.maximumf %100, %101 : vector<1x64xf32>
      %cst_39 = arith.constant 9.99999974E-6 : f32
      %103 = vector.broadcast %cst_39 : f32 to vector<1x64xf32>
      %104 = arith.addf %102, %103 : vector<1x64xf32>
      %105 = math.rsqrt %104 : vector<1x64xf32>
      %106 = arith.mulf %80, %105 : vector<1x64xf32>
      %107 = arith.mulf %93, %106 : vector<1x64xf32>
      %108 = arith.subf %81, %107 : vector<1x64xf32>
      %109 = vector.broadcast %106 : vector<1x64xf32> to vector<128x64xf32>
      %110 = arith.mulf %89, %109 : vector<128x64xf32>
      %111 = vector.broadcast %108 : vector<1x64xf32> to vector<128x64xf32>
      %112 = arith.addf %110, %111 : vector<128x64xf32>
      %113 = vector.extract_strided_slice %12 {offsets = [24, 0], sizes = [1, 32], strides = [1, 1]} : vector<40x256xf32> to vector<1x32xf32>
      %114 = vector.extract_strided_slice %12 {offsets = [25, 0], sizes = [1, 32], strides = [1, 1]} : vector<40x256xf32> to vector<1x32xf32>
      %115 = vector.extract_strided_slice %12 {offsets = [26, 0], sizes = [1, 32], strides = [1, 1]} : vector<40x256xf32> to vector<1x32xf32>
      %116 = arith.truncf %112 : vector<128x64xf32> to vector<128x64xbf16>
      %c0_40 = arith.constant 0 : index
      %c0_41 = arith.constant 0 : index
      %117 = vector.load %arg5[%c0_40, %c0_41] : memref<64x32xbf16, #tpu.memory_space<vmem>>, vector<64x32xbf16>
      %cst_42 = arith.constant dense<0.000000e+00> : vector<128x32xf32>
      %118 = tpu.matmul %116, %117, %cst_42 {dimension_numbers = #tpu.dot_dimension_numbers<[1], [0], [0], [1], [0, 0, 1, 1], [], []>} : vector<128x64xbf16>, vector<64x32xbf16>, vector<128x32xf32> -> vector<128x32xf32>
      %119 = vector.broadcast %113 : vector<1x32xf32> to vector<128x32xf32>
      %120 = arith.addf %118, %119 : vector<128x32xf32>
      %cst_43 = arith.constant 3.300000e-01 : f32
      %121 = vector.broadcast %cst_43 : f32 to vector<128x32xf32>
      %122 = arith.mulf %121, %120 : vector<128x32xf32>
      %123 = arith.maximumf %120, %122 : vector<128x32xf32>
      %cst_44 = arith.constant dense<0.000000e+00> : vector<32xf32>
      %124 = vector.multi_reduction <add>, %123, %cst_44 [0] : vector<128x32xf32> to vector<32xf32>
      %125 = vector.shape_cast %124 : vector<32xf32> to vector<1x32xf32>
      %cst_45 = arith.constant 1.280000e+02 : f32
      %126 = vector.broadcast %cst_45 : f32 to vector<1x32xf32>
      %127 = arith.divf %125, %126 : vector<1x32xf32>
      %128 = arith.mulf %123, %123 : vector<128x32xf32>
      %cst_46 = arith.constant dense<0.000000e+00> : vector<32xf32>
      %129 = vector.multi_reduction <add>, %128, %cst_46 [0] : vector<128x32xf32> to vector<32xf32>
      %130 = vector.shape_cast %129 : vector<32xf32> to vector<1x32xf32>
      %cst_47 = arith.constant 1.280000e+02 : f32
      %131 = vector.broadcast %cst_47 : f32 to vector<1x32xf32>
      %132 = arith.divf %130, %131 : vector<1x32xf32>
      %133 = arith.mulf %127, %127 : vector<1x32xf32>
      %134 = arith.subf %132, %133 : vector<1x32xf32>
      %cst_48 = arith.constant 0.000000e+00 : f32
      %135 = vector.broadcast %cst_48 : f32 to vector<1x32xf32>
      %136 = arith.maximumf %134, %135 : vector<1x32xf32>
      %cst_49 = arith.constant 9.99999974E-6 : f32
      %137 = vector.broadcast %cst_49 : f32 to vector<1x32xf32>
      %138 = arith.addf %136, %137 : vector<1x32xf32>
      %139 = math.rsqrt %138 : vector<1x32xf32>
      %140 = arith.mulf %114, %139 : vector<1x32xf32>
      %141 = arith.mulf %127, %140 : vector<1x32xf32>
      %142 = arith.subf %115, %141 : vector<1x32xf32>
      %143 = vector.broadcast %140 : vector<1x32xf32> to vector<128x32xf32>
      %144 = arith.mulf %123, %143 : vector<128x32xf32>
      %145 = vector.broadcast %142 : vector<1x32xf32> to vector<128x32xf32>
      %146 = arith.addf %144, %145 : vector<128x32xf32>
      %147 = vector.extract_strided_slice %12 {offsets = [32, 0], sizes = [1, 128], strides = [1, 1]} : vector<40x256xf32> to vector<1x128xf32>
      %148 = arith.truncf %146 : vector<128x32xf32> to vector<128x32xbf16>
      %c0_50 = arith.constant 0 : index
      %c0_51 = arith.constant 0 : index
      %149 = vector.load %arg6[%c0_50, %c0_51] : memref<32x128xbf16, #tpu.memory_space<vmem>>, vector<32x128xbf16>
      %cst_52 = arith.constant dense<0.000000e+00> : vector<128x128xf32>
      %150 = tpu.matmul %148, %149, %cst_52 {dimension_numbers = #tpu.dot_dimension_numbers<[1], [0], [0], [1], [0, 0, 1, 1], [], []>} : vector<128x32xbf16>, vector<32x128xbf16>, vector<128x128xf32> -> vector<128x128xf32>
      %151 = vector.broadcast %147 : vector<1x128xf32> to vector<128x128xf32>
      %152 = arith.addf %150, %151 : vector<128x128xf32>
      %c0_53 = arith.constant 0 : index
      %c0_54 = arith.constant 0 : index
      %153 = vector.load %arg8[%c0_53, %c0_54] : memref<128x128xf32, #tpu.memory_space<vmem>>, vector<128x128xf32>
      tpu.vector_store %arg8[%c0_53, %c0_54], %152 {strides = array<i32>} : memref<128x128xf32, #tpu.memory_space<vmem>>, vector<128x128xf32>,
    } else {
    }
    return
  }
  func.func @transform_0(%arg0: i32) -> (i32, i32) {
    %c0_i32 = arith.constant 0 : i32
    %c0_i32_0 = arith.constant 0 : i32
    return %c0_i32, %arg0 : i32, i32
  }
  func.func @transform_1(%arg0: i32) -> (i32, i32) {
    %c0_i32 = arith.constant 0 : i32
    %c0_i32_0 = arith.constant 0 : i32
    return %arg0, %c0_i32 : i32, i32
  }
  func.func @transform_2(%arg0: i32) -> (i32, i32) {
    %c0_i32 = arith.constant 0 : i32
    %c0_i32_0 = arith.constant 0 : i32
    %c0_i32_1 = arith.constant 0 : i32
    return %c0_i32, %c0_i32_0 : i32, i32
  }
  func.func @transform_3(%arg0: i32) -> (i32, i32) {
    %c0_i32 = arith.constant 0 : i32
    %c0_i32_0 = arith.constant 0 : i32
    %c0_i32_1 = arith.constant 0 : i32
    return %c0_i32, %c0_i32_0 : i32, i32
  }
  func.func @transform_4(%arg0: i32) -> (i32, i32) {
    %c0_i32 = arith.constant 0 : i32
    %c0_i32_0 = arith.constant 0 : i32
    %c0_i32_1 = arith.constant 0 : i32
    return %c0_i32, %c0_i32_0 : i32, i32
  }
  func.func @transform_5(%arg0: i32) -> (i32, i32) {
    %c0_i32 = arith.constant 0 : i32
    %c0_i32_0 = arith.constant 0 : i32
    %c0_i32_1 = arith.constant 0 : i32
    return %c0_i32, %c0_i32_0 : i32, i32
  }
  func.func @transform_6(%arg0: i32) -> (i32, i32) {
    %c0_i32 = arith.constant 0 : i32
    %c0_i32_0 = arith.constant 0 : i32
    %c0_i32_1 = arith.constant 0 : i32
    return %c0_i32, %c0_i32_0 : i32, i32
  }
  func.func @transform_7(%arg0: i32) -> (i32, i32) {
    %c0_i32 = arith.constant 0 : i32
    %c0_i32_0 = arith.constant 0 : i32
    %c0_i32_1 = arith.constant 0 : i32
    return %c0_i32, %c0_i32_0 : i32, i32
  }
}

</mosaic_0001>

<llo_original>
// kernel: tpu_custom_call.1
$region0: #{tpu_custom_call.1}
  #allocation0 [shape = 'u32[]', space=smem, size = 0x4, offset = 0x4, fixed_abs, tag = 'smem constant byte address 0x4 - core index']
  #allocation1 [shape = 'u32[72,128]{1,0:T(1,128)}', space=vmem, size = 0x9000, scoped, tag = 'internal scratch']
  #allocation2 [shape = 'f32[128,256]{1,0:T(8,128)}', space=vmem, size = 0x20000, scoped, tag = 'scratch operand']
  %s0 = inlined_call_operand.hbm [shape: bf16[128,384], index: 0, kind: input, shape index: {}]
  %s1 = inlined_call_operand.hbm [shape: bf16[384,256], index: 1, kind: input, shape index: {}]
  %s2 = inlined_call_operand.vmem [shape: bf16[256,128], index: 2, kind: input, shape index: {}]
  %s3 = inlined_call_operand.vmem [shape: bf16[128,64], index: 3, kind: input, shape index: {}]
  %s4 = inlined_call_operand.vmem [shape: bf16[64,32], index: 4, kind: input, shape index: {}]
  %s5 = inlined_call_operand.vmem [shape: bf16[32,128], index: 5, kind: input, shape index: {}]
  %s6 = inlined_call_operand.hbm [shape: f32[40,256], index: 6, kind: input, shape index: {}]
  %s7 = inlined_call_operand.hbm [shape: f32[128,128], index: 7, kind: output, shape index: {}]
  %s8 = sld [smem:[#allocation0]]
  $region81: #{tpu_custom_call.1} parent=0
    _
  %s10 = ssub.s32 1, %s8
  %s11 = scalar_select 0, %s10, %s8
  $region1: #{tpu_custom_call.1} parent=0
    #allocation3 [shape = 'u8[65536]{0}', space=vmem, size = 0x10000, scoped, tag = 'input window, operand 0']
    #allocation4 [shape = 's32[2]{0}', space=sflag, size = 0x8, scoped, tag = 'scoped memory for tpu_custom_call.1']
    #allocation5 [shape = 's32[2]{0}', space=sflag, size = 0x8, scoped, tag = 'scoped memory for tpu_custom_call.1']
    #allocation6 [shape = 'u8[131072]{0}', space=vmem, size = 0x20000, scoped, tag = 'input window, operand 1']
    #allocation7 [shape = 's32[2]{0}', space=sflag, size = 0x8, scoped, tag = 'scoped memory for tpu_custom_call.1']
    #allocation8 [shape = 'u8[40960]{0}', space=vmem, size = 0xa000, scoped, tag = 'input window, operand 6, single buffered']
    #allocation9 [shape = 'u8[65536]{0}', space=vmem, size = 0x10000, scoped, tag = 'output window, operand 0, single buffered']
    %12 = vsyncpa [#allocation4], 0
    %s13 = scalar_lea.sflag [#allocation4], 1
    %14 = vsyncpa %s13, 0
    %15 = vsyncpa [#allocation7], 0
    %s16 = scalar_lea.sflag [#allocation7], 1
    %17 = vsyncpa %s16, 0
    %18 = vsyncpa [#allocation5], 0
    loop: start=0, step=1, limit=5
    $region2: #{tpu_custom_call.1} parent=1 // loop_pre_header
      _
    $region3: #{tpu_custom_call.1} parent=1 // loop_header
      %s20 = sphi 0, %s24
      %p21 = scmp.ge.s32.totalorder %s20, 5
      %s30 = sphi 0, %s32
      %s33 = sphi 0, %s30
      %s34 = sphi 0, %s33
      %s50 = sphi 0, %s34
      %s56 = sphi 0, %s58
      %s59 = sphi 0, %s56
      %s60 = sphi 0, %s59
      %s76 = sphi 0, %s60
      %s80 = sphi 0, %s80
      %s82 = sphi 0, %s80
      %s83 = sphi 0, %s82
      %s97 = sphi 0, %s83
      %s101 = sphi 0, %s101
      %s103 = sphi 0, %s101
      %s104 = sphi 0, %s103
      %s118 = sphi 0, %s104
      %s122 = sphi 0, %s122
      %s124 = sphi 0, %s122
      %s125 = sphi 0, %s124
      %s139 = sphi 0, %s125
      %s143 = sphi 0, %s143
      %s145 = sphi 0, %s143
      %s146 = sphi 0, %s145
      %s160 = sphi 0, %s146
      %s164 = sphi 0, %s164
      %s166 = sphi 0, %s164
      %s167 = sphi 0, %s166
      %s181 = sphi 0, %s167
      %s185 = sphi 0, %s185
      %s187 = sphi 0, %s185
      %s188 = sphi 0, %s187
      %s202 = sphi 0, %s188
    $region4: #{tpu_custom_call.1} parent=1 // loop_header_branch
      %23 = sbr.rel (%p21) target = $region8
    $region5: #{tpu_custom_call.1} parent=1 // loop_body
      %s25 = ssub.s32 %s20, 1
      %s26 = ssub.s32 %s20, 2
      %s27 = sadd.s32 %s20, 1
      %s28 = ssub.s32 %s20, %s27
      %p29 = scmp.eq.s32.totalorder %s28, 0
      %s31 = sadd.s32 %s30, 1
      %s32 = scalar_select %p29, %s30, %s31
      %p35 = pneg %p29
      %p36 = scmp.eq.s32.totalorder %s20, 2
      %p37 = por %p35, %p36
      %p38 = scmp.ne.s32.totalorder %s30, %s33
      %p39 = scmp.eq.s32.totalorder %s20, 0
      %p40 = por %p38, %p39
      %p41 = scmp.ne.s32.totalorder %s30, %s33
      %p42 = scmp.eq.s32.totalorder %s25, 2
      %p43 = por %p41, %p42
      %p44 = scmp.ne.s32.totalorder %s33, %s34
      %p45 = scmp.eq.s32.totalorder %s25, 0
      %p46 = por %p44, %p45
      %p47 = scmp.ne.s32.totalorder %s33, %s34
      %p48 = scmp.eq.s32.totalorder %s26, 2
      %p49 = por %p47, %p48
      %p51 = scmp.ne.s32.totalorder %s34, %s50
      %p52 = scmp.eq.s32.totalorder %s26, 0
      %p53 = por %p51, %p52
      %s54 = ssub.s32 %s20, %s27
      %p55 = scmp.eq.s32.totalorder %s54, 0
      %s57 = sadd.s32 %s56, 1
      %s58 = scalar_select %p55, %s56, %s57
      %p61 = pneg %p55
      %p62 = scmp.eq.s32.totalorder %s20, 2
      %p63 = por %p61, %p62
      %p64 = scmp.ne.s32.totalorder %s56, %s59
      %p65 = scmp.eq.s32.totalorder %s20, 0
      %p66 = por %p64, %p65
      %p67 = scmp.ne.s32.totalorder %s56, %s59
      %p68 = scmp.eq.s32.totalorder %s25, 2
      %p69 = por %p67, %p68
      %p70 = scmp.ne.s32.totalorder %s59, %s60
      %p71 = scmp.eq.s32.totalorder %s25, 0
      %p72 = por %p70, %p71
      %p73 = scmp.ne.s32.totalorder %s59, %s60
      %p74 = scmp.eq.s32.totalorder %s26, 2
      %p75 = por %p73, %p74
      %p77 = scmp.ne.s32.totalorder %s60, %s76
      %p78 = scmp.eq.s32.totalorder %s26, 0
      %p79 = por %p77, %p78
      %s81 = sadd.s32 %s80, 1
      %p84 = scmp.eq.s32.totalorder %s20, 2
      %p85 = scmp.ne.s32.totalorder %s80, %s82
      %p86 = scmp.eq.s32.totalorder %s20, 0
      %p87 = por %p85, %p86
      %p88 = scmp.ne.s32.totalorder %s80, %s82
      %p89 = scmp.eq.s32.totalorder %s25, 2
      %p90 = por %p88, %p89
      %p91 = scmp.ne.s32.totalorder %s82, %s83
      %p92 = scmp.eq.s32.totalorder %s25, 0
      %p93 = por %p91, %p92
      %p94 = scmp.ne.s32.totalorder %s82, %s83
      %p95 = scmp.eq.s32.totalorder %s26, 2
      %p96 = por %p94, %p95
      %p98 = scmp.ne.s32.totalorder %s83, %s97
      %p99 = scmp.eq.s32.totalorder %s26, 0
      %p100 = por %p98, %p99
      %s102 = sadd.s32 %s101, 1
      %p105 = scmp.eq.s32.totalorder %s20, 2
      %p106 = scmp.ne.s32.totalorder %s101, %s103
      %p107 = scmp.eq.s32.totalorder %s20, 0
      %p108 = por %p106, %p107
      %p109 = scmp.ne.s32.totalorder %s101, %s103
      %p110 = scmp.eq.s32.totalorder %s25, 2
      %p111 = por %p109, %p110
      %p112 = scmp.ne.s32.totalorder %s103, %s104
      %p113 = scmp.eq.s32.totalorder %s25, 0
      %p114 = por %p112, %p113
      %p115 = scmp.ne.s32.totalorder %s103, %s104
      %p116 = scmp.eq.s32.totalorder %s26, 2
      %p117 = por %p115, %p116
      %p119 = scmp.ne.s32.totalorder %s104, %s118
      %p120 = scmp.eq.s32.totalorder %s26, 0
      %p121 = por %p119, %p120
      %s123 = sadd.s32 %s122, 1
      %p126 = scmp.eq.s32.totalorder %s20, 2
      %p127 = scmp.ne.s32.totalorder %s122, %s124
      %p128 = scmp.eq.s32.totalorder %s20, 0
      %p129 = por %p127, %p128
      %p130 = scmp.ne.s32.totalorder %s122, %s124
      %p131 = scmp.eq.s32.totalorder %s25, 2
      %p132 = por %p130, %p131
      %p133 = scmp.ne.s32.totalorder %s124, %s125
      %p134 = scmp.eq.s32.totalorder %s25, 0
      %p135 = por %p133, %p134
      %p136 = scmp.ne.s32.totalorder %s124, %s125
      %p137 = scmp.eq.s32.totalorder %s26, 2
      %p138 = por %p136, %p137
      %p140 = scmp.ne.s32.totalorder %s125, %s139
      %p141 = scmp.eq.s32.totalorder %s26, 0
      %p142 = por %p140, %p141
      %s144 = sadd.s32 %s143, 1
      %p147 = scmp.eq.s32.totalorder %s20, 2
      %p148 = scmp.ne.s32.totalorder %s143, %s145
      %p149 = scmp.eq.s32.totalorder %s20, 0
      %p150 = por %p148, %p149
      %p151 = scmp.ne.s32.totalorder %s143, %s145
      %p152 = scmp.eq.s32.totalorder %s25, 2
      %p153 = por %p151, %p152
      %p154 = scmp.ne.s32.totalorder %s145, %s146
      %p155 = scmp.eq.s32.totalorder %s25, 0
      %p156 = por %p154, %p155
      %p157 = scmp.ne.s32.totalorder %s145, %s146
      %p158 = scmp.eq.s32.totalorder %s26, 2
      %p159 = por %p157, %p158
      %p161 = scmp.ne.s32.totalorder %s146, %s160
      %p162 = scmp.eq.s32.totalorder %s26, 0
      %p163 = por %p161, %p162
      %s165 = sadd.s32 %s164, 1
      %p168 = scmp.eq.s32.totalorder %s20, 2
      %p169 = scmp.ne.s32.totalorder %s164, %s166
      %p170 = scmp.eq.s32.totalorder %s20, 0
      %p171 = por %p169, %p170
      %p172 = scmp.ne.s32.totalorder %s164, %s166
      %p173 = scmp.eq.s32.totalorder %s25, 2
      %p174 = por %p172, %p173
      %p175 = scmp.ne.s32.totalorder %s166, %s167
      %p176 = scmp.eq.s32.totalorder %s25, 0
      %p177 = por %p175, %p176
      %p178 = scmp.ne.s32.totalorder %s166, %s167
      %p179 = scmp.eq.s32.totalorder %s26, 2
      %p180 = por %p178, %p179
      %p182 = scmp.ne.s32.totalorder %s167, %s181
      %p183 = scmp.eq.s32.totalorder %s26, 0
      %p184 = por %p182, %p183
      %s186 = sadd.s32 %s185, 1
      %p189 = scmp.eq.s32.totalorder %s20, 2
      %p190 = scmp.ne.s32.totalorder %s185, %s187
      %p191 = scmp.eq.s32.totalorder %s20, 0
      %p192 = por %p190, %p191
      %p193 = scmp.ne.s32.totalorder %s185, %s187
      %p194 = scmp.eq.s32.totalorder %s25, 2
      %p195 = por %p193, %p194
      %p196 = scmp.ne.s32.totalorder %s187, %s188
      %p197 = scmp.eq.s32.totalorder %s25, 0
      %p198 = por %p196, %p197
      %p199 = scmp.ne.s32.totalorder %s187, %s188
      %p200 = scmp.eq.s32.totalorder %s26, 2
      %p201 = por %p199, %p200
      %p203 = scmp.ne.s32.totalorder %s188, %s202
      %p204 = scmp.eq.s32.totalorder %s26, 0
      %p205 = por %p203, %p204
      %p206 = scmp.le.s32.totalorder 1, %s20
      %p207 = scmp.lt.s32.totalorder %s20, 4
      %p208 = pnand %p206, %p207
      %p209 = pneg %p208
      // Predicated region
      $region9: #{tpu_custom_call.1} parent=5 // pred_check
        _
      $region10: #{tpu_custom_call.1} parent=5 // pred_check_branch
        %211 = sbr.rel (%p208) target = $region12
      $region11: #{tpu_custom_call.1} parent=5 // pred_region
        %s212 = ssub.s32 %s20, 1
        // Predicated region
        $region13: #{tpu_custom_call.1} parent=11 // pred_check
          %p213 = pneg %p93
        $region14: #{tpu_custom_call.1} parent=11 // pred_check_branch
          %215 = sbr.rel (%p213) target = $region16
        $region15: #{tpu_custom_call.1} parent=11 // pred_region
          _
        $region16: #{tpu_custom_call.1} parent=11 // pred_fallthru
          _
        // Predicated region
        $region17: #{tpu_custom_call.1} parent=11 // pred_check
          %p216 = pneg %p114
        $region18: #{tpu_custom_call.1} parent=11 // pred_check_branch
          %218 = sbr.rel (%p216) target = $region20
        $region19: #{tpu_custom_call.1} parent=11 // pred_region
          _
        $region20: #{tpu_custom_call.1} parent=11 // pred_fallthru
          _
        // Predicated region
        $region21: #{tpu_custom_call.1} parent=11 // pred_check
          %p219 = pneg %p135
        $region22: #{tpu_custom_call.1} parent=11 // pred_check_branch
          %221 = sbr.rel (%p219) target = $region24
        $region23: #{tpu_custom_call.1} parent=11 // pred_region
          _
        $region24: #{tpu_custom_call.1} parent=11 // pred_fallthru
          _
        // Predicated region
        $region25: #{tpu_custom_call.1} parent=11 // pred_check
          %p222 = pneg %p156
        $region26: #{tpu_custom_call.1} parent=11 // pred_check_branch
          %224 = sbr.rel (%p222) target = $region28
        $region27: #{tpu_custom_call.1} parent=11 // pred_region
          _
        $region28: #{tpu_custom_call.1} parent=11 // pred_fallthru
          _
        // Predicated region
        $region29: #{tpu_custom_call.1} parent=11 // pred_check
          %p225 = pneg %p177
        $region30: #{tpu_custom_call.1} parent=11 // pred_check_branch
          %227 = sbr.rel (%p225) target = $region32
        $region31: #{tpu_custom_call.1} parent=11 // pred_region
          %229 = vsyncadd [#allocation7], 0
          %s230 = sshll.u32 %s6, 4
          %s231 = int_to_ptr.hbm [resolvable:$true] %s230
          %s232 = sshll.u32 [#allocation8], 4
          %s233 = int_to_ptr.vmem [resolvable:$true] %s232
          %238 = dma.hbm_to_vmem [thread:$0]  %s231, 1280, %s233, [#allocation7], 256, 256, 16
        $region32: #{tpu_custom_call.1} parent=11 // pred_fallthru
          _
      $region12: #{tpu_custom_call.1} parent=5 // pred_fallthru
        _
      %p239 = scmp.lt.s32.totalorder %s20, 3
      // Predicated region
      $region33: #{tpu_custom_call.1} parent=5 // pred_check
        %p240 = pneg %p239
      $region34: #{tpu_custom_call.1} parent=5 // pred_check_branch
        %242 = sbr.rel (%p240) target = $region36
      $region35: #{tpu_custom_call.1} parent=5 // pred_region
        // Predicated region
        $region37: #{tpu_custom_call.1} parent=35 // pred_check
          %p243 = pneg %p40
        $region38: #{tpu_custom_call.1} parent=35 // pred_check_branch
          %245 = sbr.rel (%p243) target = $region40
        $region39: #{tpu_custom_call.1} parent=35 // pred_region
          %s246 = sand.u32 %s30, 1
          %s247 = scalar_lea.sflag [#allocation4], %s246
          %s248 = sand.u32 %s30, 1
          %s249 = smul.addr %s248, 64
          %s250 = scalar_lea.vmem [#allocation3], %s249
          %252 = vsyncadd %s247, 0
          %s253 = smul.addr %s20, 4
          %s254 = scalar_lea.hbm %s0, %s253
          %s255 = sshll.u32 %s254, 4
          %s256 = int_to_ptr.hbm [resolvable:$true] %s255
          %s257 = sshll.u32 %s250, 4
          %s258 = int_to_ptr.vmem [resolvable:$true] %s257
          %263 = dma.hbm_to_vmem [thread:$0]  %s256, 1024, %s258, %s247, 192, 64, 4
        $region40: #{tpu_custom_call.1} parent=35 // pred_fallthru
          _
        // Predicated region
        $region41: #{tpu_custom_call.1} parent=35 // pred_check
          %p264 = pneg %p66
        $region42: #{tpu_custom_call.1} parent=35 // pred_check_branch
          %266 = sbr.rel (%p264) target = $region44
        $region43: #{tpu_custom_call.1} parent=35 // pred_region
          %s267 = sand.u32 %s20, 1
          %s268 = scalar_lea.sflag [#allocation7], %s267
          %s269 = sand.u32 %s56, 1
          %s270 = smul.addr %s269, 128
          %s271 = scalar_lea.vmem [#allocation6], %s270
          %s272 = smul.u32 16, %s20
          %274 = vsyncadd %s268, 0
          %s275 = smul.addr %s272, 2
          %s276 = smul.addr %s275, 4
          %s277 = scalar_lea.hbm %s1, %s276
          %s278 = sshll.u32 %s277, 4
          %s279 = int_to_ptr.hbm [resolvable:$true] %s278
          %s280 = sshll.u32 %s271, 4
          %s281 = int_to_ptr.vmem [resolvable:$true] %s280
          %286 = dma.hbm_to_vmem [thread:$0]  %s279, 2048, %s281, %s268, 128, 128, 8
        $region44: #{tpu_custom_call.1} parent=35 // pred_fallthru
          _
      $region36: #{tpu_custom_call.1} parent=5 // pred_fallthru
        _
      %p287 = scmp.le.s32.totalorder 1, %s20
      %p288 = scmp.lt.s32.totalorder %s20, 4
      %p289 = pnand %p287, %p288
      %p290 = pneg %p289
      // Predicated region
      $region45: #{tpu_custom_call.1} parent=5 // pred_check
        _
      $region46: #{tpu_custom_call.1} parent=5 // pred_check_branch
        %292 = sbr.rel (%p289) target = $region48
      $region47: #{tpu_custom_call.1} parent=5 // pred_region
        %s293 = ssub.s32 %s20, 1
        %s294 = sand.u32 %s33, 1
        %s295 = scalar_lea.sflag [#allocation4], %s294
        %s296 = sand.u32 %s33, 1
        %s297 = smul.addr %s296, 64
        %s298 = scalar_lea.vmem [#allocation3], %s297
        // Predicated region
        $region49: #{tpu_custom_call.1} parent=47 // pred_check
          %p299 = pneg %p46
        $region50: #{tpu_custom_call.1} parent=47 // pred_check_branch
          %301 = sbr.rel (%p299) target = $region52
        $region51: #{tpu_custom_call.1} parent=47 // pred_region
          %303 = dma.done %s295, 1024
        $region52: #{tpu_custom_call.1} parent=47 // pred_fallthru
          _
        %s304 = sand.u32 %s25, 1
        %s305 = scalar_lea.sflag [#allocation7], %s304
        %s306 = sand.u32 %s59, 1
        %s307 = smul.addr %s306, 128
        %s308 = scalar_lea.vmem [#allocation6], %s307
        // Predicated region
        $region53: #{tpu_custom_call.1} parent=47 // pred_check
          %p309 = pneg %p72
        $region54: #{tpu_custom_call.1} parent=47 // pred_check_branch
          %311 = sbr.rel (%p309) target = $region56
        $region55: #{tpu_custom_call.1} parent=47 // pred_region
          %313 = dma.done %s305, 2048
        $region56: #{tpu_custom_call.1} parent=47 // pred_fallthru
          _
        // Predicated region
        $region57: #{tpu_custom_call.1} parent=47 // pred_check
          %p314 = pneg %p177
        $region58: #{tpu_custom_call.1} parent=47 // pred_check_branch
          %316 = sbr.rel (%p314) target = $region60
        $region59: #{tpu_custom_call.1} parent=47 // pred_region
          %318 = dma.done [#allocation7], 1280
        $region60: #{tpu_custom_call.1} parent=47 // pred_fallthru
          _
        %s319 = sand.u32 %s33, 1
        %s320 = scalar_lea.sflag [#allocation4], %s319
        %s321 = sand.u32 %s33, 1
        %s322 = smul.addr %s321, 64
        %s323 = scalar_lea.vmem [#allocation3], %s322
        %p324 = pneg %p46
        %p325 = pneg %p43
        %s326 = sand.u32 %s25, 1
        %s327 = scalar_lea.sflag [#allocation7], %s326
        %s328 = sand.u32 %s59, 1
        %s329 = smul.addr %s328, 128
        %s330 = scalar_lea.vmem [#allocation6], %s329
        %p331 = pneg %p72
        %p332 = pneg %p69
        %p333 = pneg %p93
        %p334 = pneg %p90
        %p335 = pneg %p114
        %p336 = pneg %p111
        %p337 = pneg %p135
        %p338 = pneg %p132
        %p339 = pneg %p156
        %p340 = pneg %p153
        %p341 = pneg %p177
        %p342 = pneg %p174
        %p343 = pneg %p198
        %p344 = pneg %p195
        %s345 = smul.u32 16, %s25
        %p347 = scmp.eq.s32.totalorder %s25, 0
        // Predicated region
        $region61: #{tpu_custom_call.1} parent=47 // pred_check
          %p348 = pneg %p347
        $region62: #{tpu_custom_call.1} parent=47 // pred_check_branch
          %350 = sbr.rel (%p348) target = $region64
        $region63: #{tpu_custom_call.1} parent=47 // pred_region
          %351 = vst [vmem:[#allocation2] sm:$0xff] 0.0
          %352 = vst [vmem:[#allocation2 + $0x8] sm:$0xff] 0.0
          %353 = vst [vmem:[#allocation2 + $0x10] sm:$0xff] 0.0
          %354 = vst [vmem:[#allocation2 + $0x18] sm:$0xff] 0.0
          %355 = vst [vmem:[#allocation2 + $0x20] sm:$0xff] 0.0
          %356 = vst [vmem:[#allocation2 + $0x28] sm:$0xff] 0.0
          %357 = vst [vmem:[#allocation2 + $0x30] sm:$0xff] 0.0
          %358 = vst [vmem:[#allocation2 + $0x38] sm:$0xff] 0.0
          %359 = vst [vmem:[#allocation2 + $0x40] sm:$0xff] 0.0
          %360 = vst [vmem:[#allocation2 + $0x48] sm:$0xff] 0.0
          %361 = vst [vmem:[#allocation2 + $0x50] sm:$0xff] 0.0
          %362 = vst [vmem:[#allocation2 + $0x58] sm:$0xff] 0.0
          %363 = vst [vmem:[#allocation2 + $0x60] sm:$0xff] 0.0
          %364 = vst [vmem:[#allocation2 + $0x68] sm:$0xff] 0.0
          %365 = vst [vmem:[#allocation2 + $0x70] sm:$0xff] 0.0
          %366 = vst [vmem:[#allocation2 + $0x78] sm:$0xff] 0.0
          %367 = vst [vmem:[#allocation2 + $0x80] sm:$0xff] 0.0
          %368 = vst [vmem:[#allocation2 + $0x88] sm:$0xff] 0.0
          %369 = vst [vmem:[#allocation2 + $0x90] sm:$0xff] 0.0
          %370 = vst [vmem:[#allocation2 + $0x98] sm:$0xff] 0.0
          %371 = vst [vmem:[#allocation2 + $0xa0] sm:$0xff] 0.0
          %372 = vst [vmem:[#allocation2 + $0xa8] sm:$0xff] 0.0
          %373 = vst [vmem:[#allocation2 + $0xb0] sm:$0xff] 0.0
          %374 = vst [vmem:[#allocation2 + $0xb8] sm:$0xff] 0.0
          %375 = vst [vmem:[#allocation2 + $0xc0] sm:$0xff] 0.0
          %376 = vst [vmem:[#allocation2 + $0xc8] sm:$0xff] 0.0
          %377 = vst [vmem:[#allocation2 + $0xd0] sm:$0xff] 0.0
          %378 = vst [vmem:[#allocation2 + $0xd8] sm:$0xff] 0.0
          %379 = vst [vmem:[#allocation2 + $0xe0] sm:$0xff] 0.0
          %380 = vst [vmem:[#allocation2 + $0xe8] sm:$0xff] 0.0
          %381 = vst [vmem:[#allocation2 + $0xf0] sm:$0xff] 0.0
          %382 = vst [vmem:[#allocation2 + $0xf8] sm:$0xff] 0.0
        $region64: #{tpu_custom_call.1} parent=47 // pred_fallthru
          _
        %v383 = vld [vmem:[#allocation2] sm:$0xff]
        %v384 = vld [vmem:[#allocation2 + $0x8] sm:$0xff]
        %v385 = vld [vmem:[#allocation2 + $0x10] sm:$0xff]
        %v386 = vld [vmem:[#allocation2 + $0x18] sm:$0xff]
        %v387 = vld [vmem:[#allocation2 + $0x20] sm:$0xff]
        %v388 = vld [vmem:[#allocation2 + $0x28] sm:$0xff]
        %v389 = vld [vmem:[#allocation2 + $0x30] sm:$0xff]
        %v390 = vld [vmem:[#allocation2 + $0x38] sm:$0xff]
        %v391 = vld [vmem:[#allocation2 + $0x40] sm:$0xff]
        %v392 = vld [vmem:[#allocation2 + $0x48] sm:$0xff]
        %v393 = vld [vmem:[#allocation2 + $0x50] sm:$0xff]
        %v394 = vld [vmem:[#allocation2 + $0x58] sm:$0xff]
        %v395 = vld [vmem:[#allocation2 + $0x60] sm:$0xff]
        %v396 = vld [vmem:[#allocation2 + $0x68] sm:$0xff]
        %v397 = vld [vmem:[#allocation2 + $0x70] sm:$0xff]
        %v398 = vld [vmem:[#allocation2 + $0x78] sm:$0xff]
        %v399 = vld [vmem:[#allocation2 + $0x80] sm:$0xff]
        %v400 = vld [vmem:[#allocation2 + $0x88] sm:$0xff]
        %v401 = vld [vmem:[#allocation2 + $0x90] sm:$0xff]
        %v402 = vld [vmem:[#allocation2 + $0x98] sm:$0xff]
        %v403 = vld [vmem:[#allocation2 + $0xa0] sm:$0xff]
        %v404 = vld [vmem:[#allocation2 + $0xa8] sm:$0xff]
        %v405 = vld [vmem:[#allocation2 + $0xb0] sm:$0xff]
        %v406 = vld [vmem:[#allocation2 + $0xb8] sm:$0xff]
        %v407 = vld [vmem:[#allocation2 + $0xc0] sm:$0xff]
        %v408 = vld [vmem:[#allocation2 + $0xc8] sm:$0xff]
        %v409 = vld [vmem:[#allocation2 + $0xd0] sm:$0xff]
        %v410 = vld [vmem:[#allocation2 + $0xd8] sm:$0xff]
        %v411 = vld [vmem:[#allocation2 + $0xe0] sm:$0xff]
        %v412 = vld [vmem:[#allocation2 + $0xe8] sm:$0xff]
        %v413 = vld [vmem:[#allocation2 + $0xf0] sm:$0xff]
        %v414 = vld [vmem:[#allocation2 + $0xf8] sm:$0xff]
        %v415 = vld [vmem:[%s298] sm:$0xf]
        %v416 = vld [vmem:[%s298 + $0x4] sm:$0xf]
        %v417 = vld [vmem:[%s298 + $0x8] sm:$0xf]
        %v418 = vld [vmem:[%s298 + $0xc] sm:$0xf]
        %v419 = vld [vmem:[%s298 + $0x10] sm:$0xf]
        %v420 = vld [vmem:[%s298 + $0x14] sm:$0xf]
        %v421 = vld [vmem:[%s298 + $0x18] sm:$0xf]
        %v422 = vld [vmem:[%s298 + $0x1c] sm:$0xf]
        %v423 = vld [vmem:[%s298 + $0x20] sm:$0xf]
        %v424 = vld [vmem:[%s298 + $0x24] sm:$0xf]
        %v425 = vld [vmem:[%s298 + $0x28] sm:$0xf]
        %v426 = vld [vmem:[%s298 + $0x2c] sm:$0xf]
        %v427 = vld [vmem:[%s298 + $0x30] sm:$0xf]
        %v428 = vld [vmem:[%s298 + $0x34] sm:$0xf]
        %v429 = vld [vmem:[%s298 + $0x38] sm:$0xf]
        %v430 = vld [vmem:[%s298 + $0x3c] sm:$0xf]
        %v431 = vld [vmem:[%s308] sm:$0xff]
        %v432 = vld [vmem:[%s308 + $0x8] sm:$0xff]
        %v433 = vld [vmem:[%s308 + $0x10] sm:$0xff]
        %v434 = vld [vmem:[%s308 + $0x18] sm:$0xff]
        %v435 = vld [vmem:[%s308 + $0x20] sm:$0xff]
        %v436 = vld [vmem:[%s308 + $0x28] sm:$0xff]
        %v437 = vld [vmem:[%s308 + $0x30] sm:$0xff]
        %v438 = vld [vmem:[%s308 + $0x38] sm:$0xff]
        %v439 = vld [vmem:[%s308 + $0x40] sm:$0xff]
        %v440 = vld [vmem:[%s308 + $0x48] sm:$0xff]
        %v441 = vld [vmem:[%s308 + $0x50] sm:$0xff]
        %v442 = vld [vmem:[%s308 + $0x58] sm:$0xff]
        %v443 = vld [vmem:[%s308 + $0x60] sm:$0xff]
        %v444 = vld [vmem:[%s308 + $0x68] sm:$0xff]
        %v445 = vld [vmem:[%s308 + $0x70] sm:$0xff]
        %v446 = vld [vmem:[%s308 + $0x78] sm:$0xff]
        %v463 = vunpack.c.l.b16 %v415
        %v464 = vunpack.c.l.b16 %v416
        %v465 = vunpack.c.l.b16 %v417
        %v466 = vunpack.c.l.b16 %v418
        %v467 = vunpack.c.l.b16 %v419
        %v468 = vunpack.c.l.b16 %v420
        %v469 = vunpack.c.l.b16 %v421
        %v470 = vunpack.c.l.b16 %v422
        %v471 = vunpack.c.l.b16 %v423
        %v472 = vunpack.c.l.b16 %v424
        %v473 = vunpack.c.l.b16 %v425
        %v474 = vunpack.c.l.b16 %v426
        %v475 = vunpack.c.l.b16 %v427
        %v476 = vunpack.c.l.b16 %v428
        %v477 = vunpack.c.l.b16 %v429
        %v478 = vunpack.c.l.b16 %v430
        %v479 = vpack.c.b16 %v464, %v463
        %v480 = vpack.c.b16 %v466, %v465
        %v481 = vpack.c.b16 %v468, %v467
        %v482 = vpack.c.b16 %v470, %v469
        %v483 = vpack.c.b16 %v472, %v471
        %v484 = vpack.c.b16 %v474, %v473
        %v485 = vpack.c.b16 %v476, %v475
        %v486 = vpack.c.b16 %v478, %v477
        %v511 = vunpack.c.l.b16 %v431
        %v512 = vunpack.c.h.b16 %v431
        %v513 = vunpack.c.l.b16 %v432
        %v514 = vunpack.c.h.b16 %v432
        %v515 = vunpack.c.l.b16 %v433
        %v516 = vunpack.c.h.b16 %v433
        %v517 = vunpack.c.l.b16 %v434
        %v518 = vunpack.c.h.b16 %v434
        %v519 = vunpack.c.l.b16 %v435
        %v520 = vunpack.c.h.b16 %v435
        %v521 = vunpack.c.l.b16 %v436
        %v522 = vunpack.c.h.b16 %v436
        %v523 = vunpack.c.l.b16 %v437
        %v524 = vunpack.c.h.b16 %v437
        %v525 = vunpack.c.l.b16 %v438
        %v526 = vunpack.c.h.b16 %v438
        %v527 = vunpack.c.l.b16 %v439
        %v528 = vunpack.c.h.b16 %v439
        %v529 = vunpack.c.l.b16 %v440
        %v530 = vunpack.c.h.b16 %v440
        %v531 = vunpack.c.l.b16 %v441
        %v532 = vunpack.c.h.b16 %v441
        %v533 = vunpack.c.l.b16 %v442
        %v534 = vunpack.c.h.b16 %v442
        %v535 = vunpack.c.l.b16 %v443
        %v536 = vunpack.c.h.b16 %v443
        %v537 = vunpack.c.l.b16 %v444
        %v538 = vunpack.c.h.b16 %v444
        %v539 = vunpack.c.l.b16 %v445
        %v540 = vunpack.c.h.b16 %v445
        %v541 = vunpack.c.l.b16 %v446
        %v542 = vunpack.c.h.b16 %v446
        %v543 = vpack.c.b16 %v513, %v511
        %v544 = vpack.c.b16 %v514, %v512
        %v545 = vpack.c.b16 %v517, %v515
        %v546 = vpack.c.b16 %v518, %v516
        %v547 = vpack.c.b16 %v521, %v519
        %v548 = vpack.c.b16 %v522, %v520
        %v549 = vpack.c.b16 %v525, %v523
        %v550 = vpack.c.b16 %v526, %v524
        %v551 = vpack.c.b16 %v529, %v527
        %v552 = vpack.c.b16 %v530, %v528
        %v553 = vpack.c.b16 %v533, %v531
        %v554 = vpack.c.b16 %v534, %v532
        %v555 = vpack.c.b16 %v537, %v535
        %v556 = vpack.c.b16 %v538, %v536
        %v557 = vpack.c.b16 %v541, %v539
        %v558 = vpack.c.b16 %v542, %v540
        %575 = vmatpush.bf16.msra.mxu0 %v557
        %576 = vmatpush.bf16.msra.mxu0 %v555
        %577 = vmatpush.bf16.msra.mxu0 %v553
        %578 = vmatpush.bf16.msra.mxu0 %v551
        %579 = vmatpush.bf16.msra.mxu0 %v549
        %580 = vmatpush.bf16.msra.mxu0 %v547
        %581 = vmatpush.bf16.msra.mxu0 %v545
        %582 = vmatpush.bf16.msra.mxu0 %v543
        %583 = vmatmul.bf16.gmra.mxu0 %v479
        %v584 = vpop.f32.mrf.mxu0
        %v585 = vadd.f32 0.0, %v584
        %v586 = vpop.f32.mrf.mxu0
        %v587 = vadd.f32 0.0, %v586
        %588 = vmatmul.bf16.gmra.mxu0 %v480
        %v589 = vpop.f32.mrf.mxu0
        %v590 = vadd.f32 0.0, %v589
        %v591 = vpop.f32.mrf.mxu0
        %v592 = vadd.f32 0.0, %v591
        %593 = vmatmul.bf16.gmra.mxu0 %v481
        %v594 = vpop.f32.mrf.mxu0
        %v595 = vadd.f32 0.0, %v594
        %v596 = vpop.f32.mrf.mxu0
        %v597 = vadd.f32 0.0, %v596
        %598 = vmatmul.bf16.gmra.mxu0 %v482
        %v599 = vpop.f32.mrf.mxu0
        %v600 = vadd.f32 0.0, %v599
        %v601 = vpop.f32.mrf.mxu0
        %v602 = vadd.f32 0.0, %v601
        %603 = vmatmul.bf16.gmra.mxu0 %v483
        %v604 = vpop.f32.mrf.mxu0
        %v605 = vadd.f32 0.0, %v604
        %v606 = vpop.f32.mrf.mxu0
        %v607 = vadd.f32 0.0, %v606
        %608 = vmatmul.bf16.gmra.mxu0 %v484
        %v609 = vpop.f32.mrf.mxu0
        %v610 = vadd.f32 0.0, %v609
        %v611 = vpop.f32.mrf.mxu0
        %v612 = vadd.f32 0.0, %v611
        %613 = vmatmul.bf16.gmra.mxu0 %v485
        %v614 = vpop.f32.mrf.mxu0
        %v615 = vadd.f32 0.0, %v614
        %v616 = vpop.f32.mrf.mxu0
        %v617 = vadd.f32 0.0, %v616
        %618 = vmatmul.bf16.gmra.mxu0 %v486
        %v619 = vpop.f32.mrf.mxu0
        %v620 = vadd.f32 0.0, %v619
        %v621 = vpop.f32.mrf.mxu0
        %v622 = vadd.f32 0.0, %v621
        %623 = vdwg.mxu0
        %624 = vmatpush.bf16.msra.mxu0 %v558
        %625 = vmatpush.bf16.msra.mxu0 %v556
        %626 = vmatpush.bf16.msra.mxu0 %v554
        %627 = vmatpush.bf16.msra.mxu0 %v552
        %628 = vmatpush.bf16.msra.mxu0 %v550
        %629 = vmatpush.bf16.msra.mxu0 %v548
        %630 = vmatpush.bf16.msra.mxu0 %v546
        %631 = vmatpush.bf16.msra.mxu0 %v544
        %632 = vmatmul.bf16.gmra.mxu0 %v479
        %v633 = vpop.f32.mrf.mxu0
        %v634 = vadd.f32 0.0, %v633
        %v635 = vpop.f32.mrf.mxu0
        %v636 = vadd.f32 0.0, %v635
        %637 = vmatmul.bf16.gmra.mxu0 %v480
        %v638 = vpop.f32.mrf.mxu0
        %v639 = vadd.f32 0.0, %v638
        %v640 = vpop.f32.mrf.mxu0
        %v641 = vadd.f32 0.0, %v640
        %642 = vmatmul.bf16.gmra.mxu0 %v481
        %v643 = vpop.f32.mrf.mxu0
        %v644 = vadd.f32 0.0, %v643
        %v645 = vpop.f32.mrf.mxu0
        %v646 = vadd.f32 0.0, %v645
        %647 = vmatmul.bf16.gmra.mxu0 %v482
        %v648 = vpop.f32.mrf.mxu0
        %v649 = vadd.f32 0.0, %v648
        %v650 = vpop.f32.mrf.mxu0
        %v651 = vadd.f32 0.0, %v650
        %652 = vmatmul.bf16.gmra.mxu0 %v483
        %v653 = vpop.f32.mrf.mxu0
        %v654 = vadd.f32 0.0, %v653
        %v655 = vpop.f32.mrf.mxu0
        %v656 = vadd.f32 0.0, %v655
        %657 = vmatmul.bf16.gmra.mxu0 %v484
        %v658 = vpop.f32.mrf.mxu0
        %v659 = vadd.f32 0.0, %v658
        %v660 = vpop.f32.mrf.mxu0
        %v661 = vadd.f32 0.0, %v660
        %662 = vmatmul.bf16.gmra.mxu0 %v485
        %v663 = vpop.f32.mrf.mxu0
        %v664 = vadd.f32 0.0, %v663
        %v665 = vpop.f32.mrf.mxu0
        %v666 = vadd.f32 0.0, %v665
        %667 = vmatmul.bf16.gmra.mxu0 %v486
        %v668 = vpop.f32.mrf.mxu0
        %v669 = vadd.f32 0.0, %v668
        %v670 = vpop.f32.mrf.mxu0
        %v671 = vadd.f32 0.0, %v670
        %672 = vdwg.mxu0
        %v673 = vadd.f32 %v383, %v585
        %v674 = vadd.f32 %v384, %v634
        %v675 = vadd.f32 %v385, %v587
        %v676 = vadd.f32 %v386, %v636
        %v677 = vadd.f32 %v387, %v590
        %v678 = vadd.f32 %v388, %v639
        %v679 = vadd.f32 %v389, %v592
        %v680 = vadd.f32 %v390, %v641
        %v681 = vadd.f32 %v391, %v595
        %v682 = vadd.f32 %v392, %v644
        %v683 = vadd.f32 %v393, %v597
        %v684 = vadd.f32 %v394, %v646
        %v685 = vadd.f32 %v395, %v600
        %v686 = vadd.f32 %v396, %v649
        %v687 = vadd.f32 %v397, %v602
        %v688 = vadd.f32 %v398, %v651
        %v689 = vadd.f32 %v399, %v605
        %v690 = vadd.f32 %v400, %v654
        %v691 = vadd.f32 %v401, %v607
        %v692 = vadd.f32 %v402, %v656
        %v693 = vadd.f32 %v403, %v610
        %v694 = vadd.f32 %v404, %v659
        %v695 = vadd.f32 %v405, %v612
        %v696 = vadd.f32 %v406, %v661
        %v697 = vadd.f32 %v407, %v615
        %v698 = vadd.f32 %v408, %v664
        %v699 = vadd.f32 %v409, %v617
        %v700 = vadd.f32 %v410, %v666
        %v701 = vadd.f32 %v411, %v620
        %v702 = vadd.f32 %v412, %v669
        %v703 = vadd.f32 %v413, %v622
        %v704 = vadd.f32 %v414, %v671
        %705 = vst [vmem:[#allocation2] sm:$0xff] %v673
        %706 = vst [vmem:[#allocation2 + $0x8] sm:$0xff] %v674
        %707 = vst [vmem:[#allocation2 + $0x10] sm:$0xff] %v675
        %708 = vst [vmem:[#allocation2 + $0x18] sm:$0xff] %v676
        %709 = vst [vmem:[#allocation2 + $0x20] sm:$0xff] %v677
        %710 = vst [vmem:[#allocation2 + $0x28] sm:$0xff] %v678
        %711 = vst [vmem:[#allocation2 + $0x30] sm:$0xff] %v679
        %712 = vst [vmem:[#allocation2 + $0x38] sm:$0xff] %v680
        %713 = vst [vmem:[#allocation2 + $0x40] sm:$0xff] %v681
        %714 = vst [vmem:[#allocation2 + $0x48] sm:$0xff] %v682
        %715 = vst [vmem:[#allocation2 + $0x50] sm:$0xff] %v683
        %716 = vst [vmem:[#allocation2 + $0x58] sm:$0xff] %v684
        %717 = vst [vmem:[#allocation2 + $0x60] sm:$0xff] %v685
        %718 = vst [vmem:[#allocation2 + $0x68] sm:$0xff] %v686
        %719 = vst [vmem:[#allocation2 + $0x70] sm:$0xff] %v687
        %720 = vst [vmem:[#allocation2 + $0x78] sm:$0xff] %v688
        %721 = vst [vmem:[#allocation2 + $0x80] sm:$0xff] %v689
        %722 = vst [vmem:[#allocation2 + $0x88] sm:$0xff] %v690
        %723 = vst [vmem:[#allocation2 + $0x90] sm:$0xff] %v691
        %724 = vst [vmem:[#allocation2 + $0x98] sm:$0xff] %v692
        %725 = vst [vmem:[#allocation2 + $0xa0] sm:$0xff] %v693
        %726 = vst [vmem:[#allocation2 + $0xa8] sm:$0xff] %v694
        %727 = vst [vmem:[#allocation2 + $0xb0] sm:$0xff] %v695
        %728 = vst [vmem:[#allocation2 + $0xb8] sm:$0xff] %v696
        %729 = vst [vmem:[#allocation2 + $0xc0] sm:$0xff] %v697
        %730 = vst [vmem:[#allocation2 + $0xc8] sm:$0xff] %v698
        %731 = vst [vmem:[#allocation2 + $0xd0] sm:$0xff] %v699
        %732 = vst [vmem:[#allocation2 + $0xd8] sm:$0xff] %v700
        %733 = vst [vmem:[#allocation2 + $0xe0] sm:$0xff] %v701
        %734 = vst [vmem:[#allocation2 + $0xe8] sm:$0xff] %v702
        %735 = vst [vmem:[#allocation2 + $0xf0] sm:$0xff] %v703
        %736 = vst [vmem:[#allocation2 + $0xf8] sm:$0xff] %v704
        %p737 = scmp.eq.s32.totalorder %s25, 2
        // Predicated region
        $region65: #{tpu_custom_call.1} parent=47 // pred_check
          %p738 = pneg %p737
        $region66: #{tpu_custom_call.1} parent=47 // pred_check_branch
          %740 = sbr.rel (%p738) target = $region68
        $region67: #{tpu_custom_call.1} parent=47 // pred_region
          %v741 = vld [vmem:[#allocation8] sm:$0xff]
          %v742 = vld [vmem:[#allocation8 + $0x8] sm:$0xff]
          %v743 = vld [vmem:[#allocation8 + $0x10] sm:$0xff]
          %v744 = vld [vmem:[#allocation8 + $0x20] sm:$0xff]
          %v745 = vld [vmem:[#allocation8 + $0x30] sm:$0xff]
          %v746 = vld [vmem:[#allocation8 + $0x40] sm:$0xff]
          %v747 = vld [vmem:[#allocation2] sm:$0xff]
          %v748 = vld [vmem:[#allocation2 + $0x8] sm:$0xff]
          %v749 = vld [vmem:[#allocation2 + $0x10] sm:$0xff]
          %v750 = vld [vmem:[#allocation2 + $0x18] sm:$0xff]
          %v751 = vld [vmem:[#allocation2 + $0x20] sm:$0xff]
          %v752 = vld [vmem:[#allocation2 + $0x28] sm:$0xff]
          %v753 = vld [vmem:[#allocation2 + $0x30] sm:$0xff]
          %v754 = vld [vmem:[#allocation2 + $0x38] sm:$0xff]
          %v755 = vld [vmem:[#allocation2 + $0x40] sm:$0xff]
          %v756 = vld [vmem:[#allocation2 + $0x48] sm:$0xff]
          %v757 = vld [vmem:[#allocation2 + $0x50] sm:$0xff]
          %v758 = vld [vmem:[#allocation2 + $0x58] sm:$0xff]
          %v759 = vld [vmem:[#allocation2 + $0x60] sm:$0xff]
          %v760 = vld [vmem:[#allocation2 + $0x68] sm:$0xff]
          %v761 = vld [vmem:[#allocation2 + $0x70] sm:$0xff]
          %v762 = vld [vmem:[#allocation2 + $0x78] sm:$0xff]
          %v763 = vld [vmem:[#allocation2 + $0x80] sm:$0xff]
          %v764 = vld [vmem:[#allocation2 + $0x88] sm:$0xff]
          %v765 = vld [vmem:[#allocation2 + $0x90] sm:$0xff]
          %v766 = vld [vmem:[#allocation2 + $0x98] sm:$0xff]
          %v767 = vld [vmem:[#allocation2 + $0xa0] sm:$0xff]
          %v768 = vld [vmem:[#allocation2 + $0xa8] sm:$0xff]
          %v769 = vld [vmem:[#allocation2 + $0xb0] sm:$0xff]
          %v770 = vld [vmem:[#allocation2 + $0xb8] sm:$0xff]
          %v771 = vld [vmem:[#allocation2 + $0xc0] sm:$0xff]
          %v772 = vld [vmem:[#allocation2 + $0xc8] sm:$0xff]
          %v773 = vld [vmem:[#allocation2 + $0xd0] sm:$0xff]
          %v774 = vld [vmem:[#allocation2 + $0xd8] sm:$0xff]
          %v775 = vld [vmem:[#allocation2 + $0xe0] sm:$0xff]
          %v776 = vld [vmem:[#allocation2 + $0xe8] sm:$0xff]
          %v777 = vld [vmem:[#allocation2 + $0xf0] sm:$0xff]
          %v778 = vld [vmem:[#allocation2 + $0xf8] sm:$0xff]
          %v779 = vperm.slane %v741, 0
          %v780 = vperm.slane %v742, 0
          %v781 = vadd.f32 %v747, %v779
          %v782 = vadd.f32 %v748, %v780
          %v783 = vadd.f32 %v749, %v779
          %v784 = vadd.f32 %v750, %v780
          %v785 = vadd.f32 %v751, %v779
          %v786 = vadd.f32 %v752, %v780
          %v787 = vadd.f32 %v753, %v779
          %v788 = vadd.f32 %v754, %v780
          %v789 = vadd.f32 %v755, %v779
          %v790 = vadd.f32 %v756, %v780
          %v791 = vadd.f32 %v757, %v779
          %v792 = vadd.f32 %v758, %v780
          %v793 = vadd.f32 %v759, %v779
          %v794 = vadd.f32 %v760, %v780
          %v795 = vadd.f32 %v761, %v779
          %v796 = vadd.f32 %v762, %v780
          %v797 = vadd.f32 %v763, %v779
          %v798 = vadd.f32 %v764, %v780
          %v799 = vadd.f32 %v765, %v779
          %v800 = vadd.f32 %v766, %v780
          %v801 = vadd.f32 %v767, %v779
          %v802 = vadd.f32 %v768, %v780
          %v803 = vadd.f32 %v769, %v779
          %v804 = vadd.f32 %v770, %v780
          %v805 = vadd.f32 %v771, %v779
          %v806 = vadd.f32 %v772, %v780
          %v807 = vadd.f32 %v773, %v779
          %v808 = vadd.f32 %v774, %v780
          %v809 = vadd.f32 %v775, %v779
          %v810 = vadd.f32 %v776, %v780
          %v811 = vadd.f32 %v777, %v779
          %v812 = vadd.f32 %v778, %v780
          %v813 = vmul.f32 %v781, 0.33
          %v814 = vmul.f32 %v782, 0.33
          %v815 = vmul.f32 %v783, 0.33
          %v816 = vmul.f32 %v784, 0.33
          %v817 = vmul.f32 %v785, 0.33
          %v818 = vmul.f32 %v786, 0.33
          %v819 = vmul.f32 %v787, 0.33
          %v820 = vmul.f32 %v788, 0.33
          %v821 = vmul.f32 %v789, 0.33
          %v822 = vmul.f32 %v790, 0.33
          %v823 = vmul.f32 %v791, 0.33
          %v824 = vmul.f32 %v792, 0.33
          %v825 = vmul.f32 %v793, 0.33
          %v826 = vmul.f32 %v794, 0.33
          %v827 = vmul.f32 %v795, 0.33
          %v828 = vmul.f32 %v796, 0.33
          %v829 = vmul.f32 %v797, 0.33
          %v830 = vmul.f32 %v798, 0.33
          %v831 = vmul.f32 %v799, 0.33
          %v832 = vmul.f32 %v800, 0.33
          %v833 = vmul.f32 %v801, 0.33
          %v834 = vmul.f32 %v802, 0.33
          %v835 = vmul.f32 %v803, 0.33
          %v836 = vmul.f32 %v804, 0.33
          %v837 = vmul.f32 %v805, 0.33
          %v838 = vmul.f32 %v806, 0.33
          %v839 = vmul.f32 %v807, 0.33
          %v840 = vmul.f32 %v808, 0.33
          %v841 = vmul.f32 %v809, 0.33
          %v842 = vmul.f32 %v810, 0.33
          %v843 = vmul.f32 %v811, 0.33
          %v844 = vmul.f32 %v812, 0.33
          %v845 = vmax.f32 %v781, %v813
          %v846 = vmax.f32 %v782, %v814
          %v847 = vmax.f32 %v783, %v815
          %v848 = vmax.f32 %v784, %v816
          %v849 = vmax.f32 %v785, %v817
          %v850 = vmax.f32 %v786, %v818
          %v851 = vmax.f32 %v787, %v819
          %v852 = vmax.f32 %v788, %v820
          %v853 = vmax.f32 %v789, %v821
          %v854 = vmax.f32 %v790, %v822
          %v855 = vmax.f32 %v791, %v823
          %v856 = vmax.f32 %v792, %v824
          %v857 = vmax.f32 %v793, %v825
          %v858 = vmax.f32 %v794, %v826
          %v859 = vmax.f32 %v795, %v827
          %v860 = vmax.f32 %v796, %v828
          %v861 = vmax.f32 %v797, %v829
          %v862 = vmax.f32 %v798, %v830
          %v863 = vmax.f32 %v799, %v831
          %v864 = vmax.f32 %v800, %v832
          %v865 = vmax.f32 %v801, %v833
          %v866 = vmax.f32 %v802, %v834
          %v867 = vmax.f32 %v803, %v835
          %v868 = vmax.f32 %v804, %v836
          %v869 = vmax.f32 %v805, %v837
          %v870 = vmax.f32 %v806, %v838
          %v871 = vmax.f32 %v807, %v839
          %v872 = vmax.f32 %v808, %v840
          %v873 = vmax.f32 %v809, %v841
          %v874 = vmax.f32 %v810, %v842
          %v875 = vmax.f32 %v811, %v843
          %v876 = vmax.f32 %v812, %v844
          %v877 = vadd.f32 %v845, %v847
          %v878 = vadd.f32 %v877, %v849
          %v879 = vadd.f32 %v878, %v851
          %v880 = vadd.f32 %v879, %v853
          %v881 = vadd.f32 %v880, %v855
          %v882 = vadd.f32 %v881, %v857
          %v883 = vadd.f32 %v882, %v859
          %v884 = vadd.f32 %v883, %v861
          %v885 = vadd.f32 %v884, %v863
          %v886 = vadd.f32 %v885, %v865
          %v887 = vadd.f32 %v886, %v867
          %v888 = vadd.f32 %v887, %v869
          %v889 = vadd.f32 %v888, %v871
          %v890 = vadd.f32 %v889, %v873
          %v891 = vadd.f32 %v890, %v875
          %v892 = vrot.slane %v891, 4
          %v893 = vadd.f32 %v891, %v892
          %v894 = vrot.slane %v893, 2
          %v895 = vadd.f32 %v893, %v894
          %v896 = vrot.slane %v895, 1
          %v897 = vadd.f32 %v895, %v896
          %v898 = vadd.f32 %v846, %v848
          %v899 = vadd.f32 %v898, %v850
          %v900 = vadd.f32 %v899, %v852
          %v901 = vadd.f32 %v900, %v854
          %v902 = vadd.f32 %v901, %v856
          %v903 = vadd.f32 %v902, %v858
          %v904 = vadd.f32 %v903, %v860
          %v905 = vadd.f32 %v904, %v862
          %v906 = vadd.f32 %v905, %v864
          %v907 = vadd.f32 %v906, %v866
          %v908 = vadd.f32 %v907, %v868
          %v909 = vadd.f32 %v908, %v870
          %v910 = vadd.f32 %v909, %v872
          %v911 = vadd.f32 %v910, %v874
          %v912 = vadd.f32 %v911, %v876
          %v913 = vrot.slane %v912, 4
          %v914 = vadd.f32 %v912, %v913
          %v915 = vrot.slane %v914, 2
          %v916 = vadd.f32 %v914, %v915
          %v917 = vrot.slane %v916, 1
          %v918 = vadd.f32 %v916, %v917
          %v919 = vrcp.pop 128.0
          %v920 = vmul.f32 128.0, %v919
          %v921 = vsub.f32 1.0, %v920
          %v922 = vmul.f32 %v919, %v921
          %v923 = vadd.f32 %v919, %v922
          %vm924 = vweird.f32 %v919
          %v925 = vsel %vm924, %v919, %v923
          %v926 = vmul.f32 %v897, %v925
          %v927 = vmul.f32 %v918, %v925
          %v928 = vmul.f32 %v845, %v845
          %v929 = vmul.f32 %v846, %v846
          %v930 = vmul.f32 %v847, %v847
          %v931 = vmul.f32 %v848, %v848
          %v932 = vmul.f32 %v849, %v849
          %v933 = vmul.f32 %v850, %v850
          %v934 = vmul.f32 %v851, %v851
          %v935 = vmul.f32 %v852, %v852
          %v936 = vmul.f32 %v853, %v853
          %v937 = vmul.f32 %v854, %v854
          %v938 = vmul.f32 %v855, %v855
          %v939 = vmul.f32 %v856, %v856
          %v940 = vmul.f32 %v857, %v857
          %v941 = vmul.f32 %v858, %v858
          %v942 = vmul.f32 %v859, %v859
          %v943 = vmul.f32 %v860, %v860
          %v944 = vmul.f32 %v861, %v861
          %v945 = vmul.f32 %v862, %v862
          %v946 = vmul.f32 %v863, %v863
          %v947 = vmul.f32 %v864, %v864
          %v948 = vmul.f32 %v865, %v865
          %v949 = vmul.f32 %v866, %v866
          %v950 = vmul.f32 %v867, %v867
          %v951 = vmul.f32 %v868, %v868
          %v952 = vmul.f32 %v869, %v869
          %v953 = vmul.f32 %v870, %v870
          %v954 = vmul.f32 %v871, %v871
          %v955 = vmul.f32 %v872, %v872
          %v956 = vmul.f32 %v873, %v873
          %v957 = vmul.f32 %v874, %v874
          %v958 = vmul.f32 %v875, %v875
          %v959 = vmul.f32 %v876, %v876
          %v960 = vadd.f32 %v928, %v930
          %v961 = vadd.f32 %v960, %v932
          %v962 = vadd.f32 %v961, %v934
          %v963 = vadd.f32 %v962, %v936
          %v964 = vadd.f32 %v963, %v938
          %v965 = vadd.f32 %v964, %v940
          %v966 = vadd.f32 %v965, %v942
          %v967 = vadd.f32 %v966, %v944
          %v968 = vadd.f32 %v967, %v946
          %v969 = vadd.f32 %v968, %v948
          %v970 = vadd.f32 %v969, %v950
          %v971 = vadd.f32 %v970, %v952
          %v972 = vadd.f32 %v971, %v954
          %v973 = vadd.f32 %v972, %v956
          %v974 = vadd.f32 %v973, %v958
          %v975 = vrot.slane %v974, 4
          %v976 = vadd.f32 %v974, %v975
          %v977 = vrot.slane %v976, 2
          %v978 = vadd.f32 %v976, %v977
          %v979 = vrot.slane %v978, 1
          %v980 = vadd.f32 %v978, %v979
          %v981 = vadd.f32 %v929, %v931
          %v982 = vadd.f32 %v981, %v933
          %v983 = vadd.f32 %v982, %v935
          %v984 = vadd.f32 %v983, %v937
          %v985 = vadd.f32 %v984, %v939
          %v986 = vadd.f32 %v985, %v941
          %v987 = vadd.f32 %v986, %v943
          %v988 = vadd.f32 %v987, %v945
          %v989 = vadd.f32 %v988, %v947
          %v990 = vadd.f32 %v989, %v949
          %v991 = vadd.f32 %v990, %v951
          %v992 = vadd.f32 %v991, %v953
          %v993 = vadd.f32 %v992, %v955
          %v994 = vadd.f32 %v993, %v957
          %v995 = vadd.f32 %v994, %v959
          %v996 = vrot.slane %v995, 4
          %v997 = vadd.f32 %v995, %v996
          %v998 = vrot.slane %v997, 2
          %v999 = vadd.f32 %v997, %v998
          %v1000 = vrot.slane %v999, 1
          %v1001 = vadd.f32 %v999, %v1000
          %v1002 = vmul.f32 %v980, %v925
          %v1003 = vmul.f32 %v1001, %v925
          %v1004 = vmul.f32 %v926, %v926
          %v1005 = vmul.f32 %v927, %v927
          %v1006 = vsub.f32 %v1002, %v1004
          %v1007 = vsub.f32 %v1003, %v1005
          %v1008 = vmax.f32 %v1006, 0.0
          %v1009 = vmax.f32 %v1007, 0.0
          %v1010 = vadd.f32 %v1008, 1e-05
          %v1011 = vadd.f32 %v1009, 1e-05
          %v1012 = vrsqrt.pop %v1010
          %v1013 = vmul.f32 %v1012, %v1010
          %v1014 = vmul.f32 %v1013, %v1012
          %v1015 = vmul.f32 0.5, %v1014
          %v1016 = vsub.f32 1.5, %v1015
          %v1017 = vmul.f32 %v1012, %v1016
          %vm1018 = vweird.f32 %v1010
          %vm1019 = vweird.f32 %v1012
          %vm1020 = vmor %vm1018, %vm1019
          %v1021 = vsel %vm1020, %v1012, %v1017
          %v1022 = vrsqrt.pop %v1011
          %v1023 = vmul.f32 %v1022, %v1011
          %v1024 = vmul.f32 %v1023, %v1022
          %v1025 = vmul.f32 0.5, %v1024
          %v1026 = vsub.f32 1.5, %v1025
          %v1027 = vmul.f32 %v1022, %v1026
          %vm1028 = vweird.f32 %v1011
          %vm1029 = vweird.f32 %v1022
          %vm1030 = vmor %vm1028, %vm1029
          %v1031 = vsel %vm1030, %v1022, %v1027
          %v1032 = vmul.f32 %v741, %v1021
          %v1033 = vmul.f32 %v742, %v1031
          %v1034 = vmul.f32 %v926, %v1032
          %v1035 = vmul.f32 %v927, %v1033
          %v1038 = vrot.slane %v1034, 7
          %v1039 = vrot.slane %v1035, 7
          %v1042 = vsub.f32 %v741, %v1038
          %v1043 = vsub.f32 %v742, %v1039
          %v1044 = vperm.slane %v1032, 1
          %v1045 = vperm.slane %v1033, 1
          %v1046 = vmul.f32 %v845, %v1044
          %v1047 = vmul.f32 %v846, %v1045
          %v1048 = vmul.f32 %v847, %v1044
          %v1049 = vmul.f32 %v848, %v1045
          %v1050 = vmul.f32 %v849, %v1044
          %v1051 = vmul.f32 %v850, %v1045
          %v1052 = vmul.f32 %v851, %v1044
          %v1053 = vmul.f32 %v852, %v1045
          %v1054 = vmul.f32 %v853, %v1044
          %v1055 = vmul.f32 %v854, %v1045
          %v1056 = vmul.f32 %v855, %v1044
          %v1057 = vmul.f32 %v856, %v1045
          %v1058 = vmul.f32 %v857, %v1044
          %v1059 = vmul.f32 %v858, %v1045
          %v1060 = vmul.f32 %v859, %v1044
          %v1061 = vmul.f32 %v860, %v1045
          %v1062 = vmul.f32 %v861, %v1044
          %v1063 = vmul.f32 %v862, %v1045
          %v1064 = vmul.f32 %v863, %v1044
          %v1065 = vmul.f32 %v864, %v1045
          %v1066 = vmul.f32 %v865, %v1044
          %v1067 = vmul.f32 %v866, %v1045
          %v1068 = vmul.f32 %v867, %v1044
          %v1069 = vmul.f32 %v868, %v1045
          %v1070 = vmul.f32 %v869, %v1044
          %v1071 = vmul.f32 %v870, %v1045
          %v1072 = vmul.f32 %v871, %v1044
          %v1073 = vmul.f32 %v872, %v1045
          %v1074 = vmul.f32 %v873, %v1044
          %v1075 = vmul.f32 %v874, %v1045
          %v1076 = vmul.f32 %v875, %v1044
          %v1077 = vmul.f32 %v876, %v1045
          %v1078 = vperm.slane %v1042, 2
          %v1079 = vperm.slane %v1043, 2
          %v1080 = vadd.f32 %v1046, %v1078
          %v1081 = vadd.f32 %v1047, %v1079
          %v1082 = vadd.f32 %v1048, %v1078
          %v1083 = vadd.f32 %v1049, %v1079
          %v1084 = vadd.f32 %v1050, %v1078
          %v1085 = vadd.f32 %v1051, %v1079
          %v1086 = vadd.f32 %v1052, %v1078
          %v1087 = vadd.f32 %v1053, %v1079
          %v1088 = vadd.f32 %v1054, %v1078
          %v1089 = vadd.f32 %v1055, %v1079
          %v1090 = vadd.f32 %v1056, %v1078
          %v1091 = vadd.f32 %v1057, %v1079
          %v1092 = vadd.f32 %v1058, %v1078
          %v1093 = vadd.f32 %v1059, %v1079
          %v1094 = vadd.f32 %v1060, %v1078
          %v1095 = vadd.f32 %v1061, %v1079
          %v1096 = vadd.f32 %v1062, %v1078
          %v1097 = vadd.f32 %v1063, %v1079
          %v1098 = vadd.f32 %v1064, %v1078
          %v1099 = vadd.f32 %v1065, %v1079
          %v1100 = vadd.f32 %v1066, %v1078
          %v1101 = vadd.f32 %v1067, %v1079
          %v1102 = vadd.f32 %v1068, %v1078
          %v1103 = vadd.f32 %v1069, %v1079
          %v1104 = vadd.f32 %v1070, %v1078
          %v1105 = vadd.f32 %v1071, %v1079
          %v1106 = vadd.f32 %v1072, %v1078
          %v1107 = vadd.f32 %v1073, %v1079
          %v1108 = vadd.f32 %v1074, %v1078
          %v1109 = vadd.f32 %v1075, %v1079
          %v1110 = vadd.f32 %v1076, %v1078
          %v1111 = vadd.f32 %v1077, %v1079
          %v1112 = vpack.c.bf16 %v1082, %v1080
          %v1113 = vpack.c.bf16 %v1083, %v1081
          %v1114 = vpack.c.bf16 %v1086, %v1084
          %v1115 = vpack.c.bf16 %v1087, %v1085
          %v1116 = vpack.c.bf16 %v1090, %v1088
          %v1117 = vpack.c.bf16 %v1091, %v1089
          %v1118 = vpack.c.bf16 %v1094, %v1092
          %v1119 = vpack.c.bf16 %v1095, %v1093
          %v1120 = vpack.c.bf16 %v1098, %v1096
          %v1121 = vpack.c.bf16 %v1099, %v1097
          %v1122 = vpack.c.bf16 %v1102, %v1100
          %v1123 = vpack.c.bf16 %v1103, %v1101
          %v1124 = vpack.c.bf16 %v1106, %v1104
          %v1125 = vpack.c.bf16 %v1107, %v1105
          %v1126 = vpack.c.bf16 %v1110, %v1108
          %v1127 = vpack.c.bf16 %v1111, %v1109
          %v1128 = vld [vmem:[%s2] sm:$0xf]
          %v1129 = vld [vmem:[%s2 + $0x4] sm:$0xf]
          %v1130 = vld [vmem:[%s2 + $0x8] sm:$0xf]
          %v1131 = vld [vmem:[%s2 + $0xc] sm:$0xf]
          %v1132 = vld [vmem:[%s2 + $0x10] sm:$0xf]
          %v1133 = vld [vmem:[%s2 + $0x14] sm:$0xf]
          %v1134 = vld [vmem:[%s2 + $0x18] sm:$0xf]
          %v1135 = vld [vmem:[%s2 + $0x1c] sm:$0xf]
          %v1136 = vld [vmem:[%s2 + $0x20] sm:$0xf]
          %v1137 = vld [vmem:[%s2 + $0x24] sm:$0xf]
          %v1138 = vld [vmem:[%s2 + $0x28] sm:$0xf]
          %v1139 = vld [vmem:[%s2 + $0x2c] sm:$0xf]
          %v1140 = vld [vmem:[%s2 + $0x30] sm:$0xf]
          %v1141 = vld [vmem:[%s2 + $0x34] sm:$0xf]
          %v1142 = vld [vmem:[%s2 + $0x38] sm:$0xf]
          %v1143 = vld [vmem:[%s2 + $0x3c] sm:$0xf]
          %v1144 = vld [vmem:[%s2 + $0x40] sm:$0xf]
          %v1145 = vld [vmem:[%s2 + $0x44] sm:$0xf]
          %v1146 = vld [vmem:[%s2 + $0x48] sm:$0xf]
          %v1147 = vld [vmem:[%s2 + $0x4c] sm:$0xf]
          %v1148 = vld [vmem:[%s2 + $0x50] sm:$0xf]
          %v1149 = vld [vmem:[%s2 + $0x54] sm:$0xf]
          %v1150 = vld [vmem:[%s2 + $0x58] sm:$0xf]
          %v1151 = vld [vmem:[%s2 + $0x5c] sm:$0xf]
          %v1152 = vld [vmem:[%s2 + $0x60] sm:$0xf]
          %v1153 = vld [vmem:[%s2 + $0x64] sm:$0xf]
          %v1154 = vld [vmem:[%s2 + $0x68] sm:$0xf]
          %v1155 = vld [vmem:[%s2 + $0x6c] sm:$0xf]
          %v1156 = vld [vmem:[%s2 + $0x70] sm:$0xf]
          %v1157 = vld [vmem:[%s2 + $0x74] sm:$0xf]
          %v1158 = vld [vmem:[%s2 + $0x78] sm:$0xf]
          %v1159 = vld [vmem:[%s2 + $0x7c] sm:$0xf]
          %v1160 = vperm.slane %v743, 0
          %v1193 = vunpack.c.l.b16 %v1128
          %v1194 = vunpack.c.l.b16 %v1129
          %v1195 = vunpack.c.l.b16 %v1130
          %v1196 = vunpack.c.l.b16 %v1131
          %v1197 = vunpack.c.l.b16 %v1132
          %v1198 = vunpack.c.l.b16 %v1133
          %v1199 = vunpack.c.l.b16 %v1134
          %v1200 = vunpack.c.l.b16 %v1135
          %v1201 = vunpack.c.l.b16 %v1136
          %v1202 = vunpack.c.l.b16 %v1137
          %v1203 = vunpack.c.l.b16 %v1138
          %v1204 = vunpack.c.l.b16 %v1139
          %v1205 = vunpack.c.l.b16 %v1140
          %v1206 = vunpack.c.l.b16 %v1141
          %v1207 = vunpack.c.l.b16 %v1142
          %v1208 = vunpack.c.l.b16 %v1143
          %v1209 = vunpack.c.l.b16 %v1144
          %v1210 = vunpack.c.l.b16 %v1145
          %v1211 = vunpack.c.l.b16 %v1146
          %v1212 = vunpack.c.l.b16 %v1147
          %v1213 = vunpack.c.l.b16 %v1148
          %v1214 = vunpack.c.l.b16 %v1149
          %v1215 = vunpack.c.l.b16 %v1150
          %v1216 = vunpack.c.l.b16 %v1151
          %v1217 = vunpack.c.l.b16 %v1152
          %v1218 = vunpack.c.l.b16 %v1153
          %v1219 = vunpack.c.l.b16 %v1154
          %v1220 = vunpack.c.l.b16 %v1155
          %v1221 = vunpack.c.l.b16 %v1156
          %v1222 = vunpack.c.l.b16 %v1157
          %v1223 = vunpack.c.l.b16 %v1158
          %v1224 = vunpack.c.l.b16 %v1159
          %v1225 = vpack.c.b16 %v1194, %v1193
          %v1226 = vpack.c.b16 %v1196, %v1195
          %v1227 = vpack.c.b16 %v1198, %v1197
          %v1228 = vpack.c.b16 %v1200, %v1199
          %v1229 = vpack.c.b16 %v1202, %v1201
          %v1230 = vpack.c.b16 %v1204, %v1203
          %v1231 = vpack.c.b16 %v1206, %v1205
          %v1232 = vpack.c.b16 %v1208, %v1207
          %v1233 = vpack.c.b16 %v1210, %v1209
          %v1234 = vpack.c.b16 %v1212, %v1211
          %v1235 = vpack.c.b16 %v1214, %v1213
          %v1236 = vpack.c.b16 %v1216, %v1215
          %v1237 = vpack.c.b16 %v1218, %v1217
          %v1238 = vpack.c.b16 %v1220, %v1219
          %v1239 = vpack.c.b16 %v1222, %v1221
          %v1240 = vpack.c.b16 %v1224, %v1223
          %1257 = vmatpush.bf16.msra.mxu0 %v1232
          %1258 = vmatpush.bf16.msra.mxu0 %v1231
          %1259 = vmatpush.bf16.msra.mxu0 %v1230
          %1260 = vmatpush.bf16.msra.mxu0 %v1229
          %1261 = vmatpush.bf16.msra.mxu0 %v1228
          %1262 = vmatpush.bf16.msra.mxu0 %v1227
          %1263 = vmatpush.bf16.msra.mxu0 %v1226
          %1264 = vmatpush.bf16.msra.mxu0 %v1225
          %1265 = vmatmul.bf16.gmra.mxu0 %v1112
          %v1266 = vpop.f32.mrf.mxu0
          %v1267 = vadd.f32 %v1160, %v1266
          %v1268 = vpop.f32.mrf.mxu0
          %v1269 = vadd.f32 %v1160, %v1268
          %1270 = vmatmul.bf16.gmra.mxu0 %v1114
          %v1271 = vpop.f32.mrf.mxu0
          %v1272 = vadd.f32 %v1160, %v1271
          %v1273 = vpop.f32.mrf.mxu0
          %v1274 = vadd.f32 %v1160, %v1273
          %1275 = vmatmul.bf16.gmra.mxu0 %v1116
          %v1276 = vpop.f32.mrf.mxu0
          %v1277 = vadd.f32 %v1160, %v1276
          %v1278 = vpop.f32.mrf.mxu0
          %v1279 = vadd.f32 %v1160, %v1278
          %1280 = vmatmul.bf16.gmra.mxu0 %v1118
          %v1281 = vpop.f32.mrf.mxu0
          %v1282 = vadd.f32 %v1160, %v1281
          %v1283 = vpop.f32.mrf.mxu0
          %v1284 = vadd.f32 %v1160, %v1283
          %1285 = vmatmul.bf16.gmra.mxu0 %v1120
          %v1286 = vpop.f32.mrf.mxu0
          %v1287 = vadd.f32 %v1160, %v1286
          %v1288 = vpop.f32.mrf.mxu0
          %v1289 = vadd.f32 %v1160, %v1288
          %1290 = vmatmul.bf16.gmra.mxu0 %v1122
          %v1291 = vpop.f32.mrf.mxu0
          %v1292 = vadd.f32 %v1160, %v1291
          %v1293 = vpop.f32.mrf.mxu0
          %v1294 = vadd.f32 %v1160, %v1293
          %1295 = vmatmul.bf16.gmra.mxu0 %v1124
          %v1296 = vpop.f32.mrf.mxu0
          %v1297 = vadd.f32 %v1160, %v1296
          %v1298 = vpop.f32.mrf.mxu0
          %v1299 = vadd.f32 %v1160, %v1298
          %1300 = vmatmul.bf16.gmra.mxu0 %v1126
          %v1301 = vpop.f32.mrf.mxu0
          %v1302 = vadd.f32 %v1160, %v1301
          %v1303 = vpop.f32.mrf.mxu0
          %v1304 = vadd.f32 %v1160, %v1303
          %1305 = vdwg.mxu0
          %1306 = vmatpush.bf16.msra.mxu0 %v1240
          %1307 = vmatpush.bf16.msra.mxu0 %v1239
          %1308 = vmatpush.bf16.msra.mxu0 %v1238
          %1309 = vmatpush.bf16.msra.mxu0 %v1237
          %1310 = vmatpush.bf16.msra.mxu0 %v1236
          %1311 = vmatpush.bf16.msra.mxu0 %v1235
          %1312 = vmatpush.bf16.msra.mxu0 %v1234
          %1313 = vmatpush.bf16.msra.mxu0 %v1233
          %1314 = vmatmul.bf16.gmra.mxu0 %v1113
          %v1315 = vpop.f32.mrf.mxu0
          %v1316 = vadd.f32 %v1267, %v1315
          %v1317 = vpop.f32.mrf.mxu0
          %v1318 = vadd.f32 %v1269, %v1317
          %1319 = vmatmul.bf16.gmra.mxu0 %v1115
          %v1320 = vpop.f32.mrf.mxu0
          %v1321 = vadd.f32 %v1272, %v1320
          %v1322 = vpop.f32.mrf.mxu0
          %v1323 = vadd.f32 %v1274, %v1322
          %1324 = vmatmul.bf16.gmra.mxu0 %v1117
          %v1325 = vpop.f32.mrf.mxu0
          %v1326 = vadd.f32 %v1277, %v1325
          %v1327 = vpop.f32.mrf.mxu0
          %v1328 = vadd.f32 %v1279, %v1327
          %1329 = vmatmul.bf16.gmra.mxu0 %v1119
          %v1330 = vpop.f32.mrf.mxu0
          %v1331 = vadd.f32 %v1282, %v1330
          %v1332 = vpop.f32.mrf.mxu0
          %v1333 = vadd.f32 %v1284, %v1332
          %1334 = vmatmul.bf16.gmra.mxu0 %v1121
          %v1335 = vpop.f32.mrf.mxu0
          %v1336 = vadd.f32 %v1287, %v1335
          %v1337 = vpop.f32.mrf.mxu0
          %v1338 = vadd.f32 %v1289, %v1337
          %1339 = vmatmul.bf16.gmra.mxu0 %v1123
          %v1340 = vpop.f32.mrf.mxu0
          %v1341 = vadd.f32 %v1292, %v1340
          %v1342 = vpop.f32.mrf.mxu0
          %v1343 = vadd.f32 %v1294, %v1342
          %1344 = vmatmul.bf16.gmra.mxu0 %v1125
          %v1345 = vpop.f32.mrf.mxu0
          %v1346 = vadd.f32 %v1297, %v1345
          %v1347 = vpop.f32.mrf.mxu0
          %v1348 = vadd.f32 %v1299, %v1347
          %1349 = vmatmul.bf16.gmra.mxu0 %v1127
          %v1350 = vpop.f32.mrf.mxu0
          %v1351 = vadd.f32 %v1302, %v1350
          %v1352 = vpop.f32.mrf.mxu0
          %v1353 = vadd.f32 %v1304, %v1352
          %1354 = vdwg.mxu0
          %v1355 = vmul.f32 %v1316, 0.33
          %v1356 = vmul.f32 %v1318, 0.33
          %v1357 = vmul.f32 %v1321, 0.33
          %v1358 = vmul.f32 %v1323, 0.33
          %v1359 = vmul.f32 %v1326, 0.33
          %v1360 = vmul.f32 %v1328, 0.33
          %v1361 = vmul.f32 %v1331, 0.33
          %v1362 = vmul.f32 %v1333, 0.33
          %v1363 = vmul.f32 %v1336, 0.33
          %v1364 = vmul.f32 %v1338, 0.33
          %v1365 = vmul.f32 %v1341, 0.33
          %v1366 = vmul.f32 %v1343, 0.33
          %v1367 = vmul.f32 %v1346, 0.33
          %v1368 = vmul.f32 %v1348, 0.33
          %v1369 = vmul.f32 %v1351, 0.33
          %v1370 = vmul.f32 %v1353, 0.33
          %v1371 = vmax.f32 %v1316, %v1355
          %v1372 = vmax.f32 %v1318, %v1356
          %v1373 = vmax.f32 %v1321, %v1357
          %v1374 = vmax.f32 %v1323, %v1358
          %v1375 = vmax.f32 %v1326, %v1359
          %v1376 = vmax.f32 %v1328, %v1360
          %v1377 = vmax.f32 %v1331, %v1361
          %v1378 = vmax.f32 %v1333, %v1362
          %v1379 = vmax.f32 %v1336, %v1363
          %v1380 = vmax.f32 %v1338, %v1364
          %v1381 = vmax.f32 %v1341, %v1365
          %v1382 = vmax.f32 %v1343, %v1366
          %v1383 = vmax.f32 %v1346, %v1367
          %v1384 = vmax.f32 %v1348, %v1368
          %v1385 = vmax.f32 %v1351, %v1369
          %v1386 = vmax.f32 %v1353, %v1370
          %v1387 = vadd.f32 %v1371, %v1372
          %v1388 = vadd.f32 %v1387, %v1373
          %v1389 = vadd.f32 %v1388, %v1374
          %v1390 = vadd.f32 %v1389, %v1375
          %v1391 = vadd.f32 %v1390, %v1376
          %v1392 = vadd.f32 %v1391, %v1377
          %v1393 = vadd.f32 %v1392, %v1378
          %v1394 = vadd.f32 %v1393, %v1379
          %v1395 = vadd.f32 %v1394, %v1380
          %v1396 = vadd.f32 %v1395, %v1381
          %v1397 = vadd.f32 %v1396, %v1382
          %v1398 = vadd.f32 %v1397, %v1383
          %v1399 = vadd.f32 %v1398, %v1384
          %v1400 = vadd.f32 %v1399, %v1385
          %v1401 = vadd.f32 %v1400, %v1386
          %v1402 = vrot.slane %v1401, 4
          %v1403 = vadd.f32 %v1401, %v1402
          %v1404 = vrot.slane %v1403, 2
          %v1405 = vadd.f32 %v1403, %v1404
          %v1406 = vrot.slane %v1405, 1
          %v1407 = vadd.f32 %v1405, %v1406
          %v1408 = vmul.f32 %v1407, %v925
          %v1409 = vmul.f32 %v1371, %v1371
          %v1410 = vmul.f32 %v1372, %v1372
          %v1411 = vmul.f32 %v1373, %v1373
          %v1412 = vmul.f32 %v1374, %v1374
          %v1413 = vmul.f32 %v1375, %v1375
          %v1414 = vmul.f32 %v1376, %v1376
          %v1415 = vmul.f32 %v1377, %v1377
          %v1416 = vmul.f32 %v1378, %v1378
          %v1417 = vmul.f32 %v1379, %v1379
          %v1418 = vmul.f32 %v1380, %v1380
          %v1419 = vmul.f32 %v1381, %v1381
          %v1420 = vmul.f32 %v1382, %v1382
          %v1421 = vmul.f32 %v1383, %v1383
          %v1422 = vmul.f32 %v1384, %v1384
          %v1423 = vmul.f32 %v1385, %v1385
          %v1424 = vmul.f32 %v1386, %v1386
          %v1425 = vadd.f32 %v1409, %v1410
          %v1426 = vadd.f32 %v1425, %v1411
          %v1427 = vadd.f32 %v1426, %v1412
          %v1428 = vadd.f32 %v1427, %v1413
          %v1429 = vadd.f32 %v1428, %v1414
          %v1430 = vadd.f32 %v1429, %v1415
          %v1431 = vadd.f32 %v1430, %v1416
          %v1432 = vadd.f32 %v1431, %v1417
          %v1433 = vadd.f32 %v1432, %v1418
          %v1434 = vadd.f32 %v1433, %v1419
          %v1435 = vadd.f32 %v1434, %v1420
          %v1436 = vadd.f32 %v1435, %v1421
          %v1437 = vadd.f32 %v1436, %v1422
          %v1438 = vadd.f32 %v1437, %v1423
          %v1439 = vadd.f32 %v1438, %v1424
          %v1440 = vrot.slane %v1439, 4
          %v1441 = vadd.f32 %v1439, %v1440
          %v1442 = vrot.slane %v1441, 2
          %v1443 = vadd.f32 %v1441, %v1442
          %v1444 = vrot.slane %v1443, 1
          %v1445 = vadd.f32 %v1443, %v1444
          %v1446 = vmul.f32 %v1445, %v925
          %v1447 = vmul.f32 %v1408, %v1408
          %v1448 = vsub.f32 %v1446, %v1447
          %v1449 = vmax.f32 %v1448, 0.0
          %v1450 = vadd.f32 %v1449, 1e-05
          %v1451 = vrsqrt.pop %v1450
          %v1452 = vmul.f32 %v1451, %v1450
          %v1453 = vmul.f32 %v1452, %v1451
          %v1454 = vmul.f32 0.5, %v1453
          %v1455 = vsub.f32 1.5, %v1454
          %v1456 = vmul.f32 %v1451, %v1455
          %vm1457 = vweird.f32 %v1450
          %vm1458 = vweird.f32 %v1451
          %vm1459 = vmor %vm1457, %vm1458
          %v1460 = vsel %vm1459, %v1451, %v1456
          %v1461 = vmul.f32 %v743, %v1460
          %v1462 = vmul.f32 %v1408, %v1461
          %v1464 = vrot.slane %v1462, 7
          %v1466 = vsub.f32 %v743, %v1464
          %v1467 = vperm.slane %v1461, 1
          %v1468 = vmul.f32 %v1371, %v1467
          %v1469 = vmul.f32 %v1372, %v1467
          %v1470 = vmul.f32 %v1373, %v1467
          %v1471 = vmul.f32 %v1374, %v1467
          %v1472 = vmul.f32 %v1375, %v1467
          %v1473 = vmul.f32 %v1376, %v1467
          %v1474 = vmul.f32 %v1377, %v1467
          %v1475 = vmul.f32 %v1378, %v1467
          %v1476 = vmul.f32 %v1379, %v1467
          %v1477 = vmul.f32 %v1380, %v1467
          %v1478 = vmul.f32 %v1381, %v1467
          %v1479 = vmul.f32 %v1382, %v1467
          %v1480 = vmul.f32 %v1383, %v1467
          %v1481 = vmul.f32 %v1384, %v1467
          %v1482 = vmul.f32 %v1385, %v1467
          %v1483 = vmul.f32 %v1386, %v1467
          %v1484 = vperm.slane %v1466, 2
          %v1485 = vadd.f32 %v1468, %v1484
          %v1486 = vadd.f32 %v1469, %v1484
          %v1487 = vadd.f32 %v1470, %v1484
          %v1488 = vadd.f32 %v1471, %v1484
          %v1489 = vadd.f32 %v1472, %v1484
          %v1490 = vadd.f32 %v1473, %v1484
          %v1491 = vadd.f32 %v1474, %v1484
          %v1492 = vadd.f32 %v1475, %v1484
          %v1493 = vadd.f32 %v1476, %v1484
          %v1494 = vadd.f32 %v1477, %v1484
          %v1495 = vadd.f32 %v1478, %v1484
          %v1496 = vadd.f32 %v1479, %v1484
          %v1497 = vadd.f32 %v1480, %v1484
          %v1498 = vadd.f32 %v1481, %v1484
          %v1499 = vadd.f32 %v1482, %v1484
          %v1500 = vadd.f32 %v1483, %v1484
          %v1501 = vpack.c.bf16 %v1486, %v1485
          %v1502 = vpack.c.bf16 %v1488, %v1487
          %v1503 = vpack.c.bf16 %v1490, %v1489
          %v1504 = vpack.c.bf16 %v1492, %v1491
          %v1505 = vpack.c.bf16 %v1494, %v1493
          %v1506 = vpack.c.bf16 %v1496, %v1495
          %v1507 = vpack.c.bf16 %v1498, %v1497
          %v1508 = vpack.c.bf16 %v1500, %v1499
          %v1509 = vld [vmem:[%s3] sm:$0xf]
          %v1510 = vld [vmem:[%s3 + $0x4] sm:$0xf]
          %v1511 = vld [vmem:[%s3 + $0x8] sm:$0xf]
          %v1512 = vld [vmem:[%s3 + $0xc] sm:$0xf]
          %v1513 = vld [vmem:[%s3 + $0x10] sm:$0xf]
          %v1514 = vld [vmem:[%s3 + $0x14] sm:$0xf]
          %v1515 = vld [vmem:[%s3 + $0x18] sm:$0xf]
          %v1516 = vld [vmem:[%s3 + $0x1c] sm:$0xf]
          %v1517 = vld [vmem:[%s3 + $0x20] sm:$0xf]
          %v1518 = vld [vmem:[%s3 + $0x24] sm:$0xf]
          %v1519 = vld [vmem:[%s3 + $0x28] sm:$0xf]
          %v1520 = vld [vmem:[%s3 + $0x2c] sm:$0xf]
          %v1521 = vld [vmem:[%s3 + $0x30] sm:$0xf]
          %v1522 = vld [vmem:[%s3 + $0x34] sm:$0xf]
          %v1523 = vld [vmem:[%s3 + $0x38] sm:$0xf]
          %v1524 = vld [vmem:[%s3 + $0x3c] sm:$0xf]
          %v1525 = vperm.slane %v744, 0
          %v1542 = vunpack.c.l.b16 %v1509
          %v1543 = vunpack.c.l.b16 %v1510
          %v1544 = vunpack.c.l.b16 %v1511
          %v1545 = vunpack.c.l.b16 %v1512
          %v1546 = vunpack.c.l.b16 %v1513
          %v1547 = vunpack.c.l.b16 %v1514
          %v1548 = vunpack.c.l.b16 %v1515
          %v1549 = vunpack.c.l.b16 %v1516
          %v1550 = vunpack.c.l.b16 %v1517
          %v1551 = vunpack.c.l.b16 %v1518
          %v1552 = vunpack.c.l.b16 %v1519
          %v1553 = vunpack.c.l.b16 %v1520
          %v1554 = vunpack.c.l.b16 %v1521
          %v1555 = vunpack.c.l.b16 %v1522
          %v1556 = vunpack.c.l.b16 %v1523
          %v1557 = vunpack.c.l.b16 %v1524
          %v1558 = vpack.c.b16 %v1543, %v1542
          %v1559 = vpack.c.b16 %v1545, %v1544
          %v1560 = vpack.c.b16 %v1547, %v1546
          %v1561 = vpack.c.b16 %v1549, %v1548
          %v1562 = vpack.c.b16 %v1551, %v1550
          %v1563 = vpack.c.b16 %v1553, %v1552
          %v1564 = vpack.c.b16 %v1555, %v1554
          %v1565 = vpack.c.b16 %v1557, %v1556
          %1574 = vmatpush.bf16.msra.mxu0 %v1565
          %1575 = vmatpush.bf16.msra.mxu0 %v1564
          %1576 = vmatpush.bf16.msra.mxu0 %v1563
          %1577 = vmatpush.bf16.msra.mxu0 %v1562
          %1578 = vmatpush.bf16.msra.mxu0 %v1561
          %1579 = vmatpush.bf16.msra.mxu0 %v1560
          %1580 = vmatpush.bf16.msra.mxu0 %v1559
          %1581 = vmatpush.bf16.msra.mxu0 %v1558
          %1582 = vmatmul.bf16.gmra.mxu0 %v1501
          %v1583 = vpop.f32.mrf.mxu0
          %v1584 = vadd.f32 %v1525, %v1583
          %v1585 = vpop.f32.mrf.mxu0
          %v1586 = vadd.f32 %v1525, %v1585
          %1587 = vmatmul.bf16.gmra.mxu0 %v1502
          %v1588 = vpop.f32.mrf.mxu0
          %v1589 = vadd.f32 %v1525, %v1588
          %v1590 = vpop.f32.mrf.mxu0
          %v1591 = vadd.f32 %v1525, %v1590
          %1592 = vmatmul.bf16.gmra.mxu0 %v1503
          %v1593 = vpop.f32.mrf.mxu0
          %v1594 = vadd.f32 %v1525, %v1593
          %v1595 = vpop.f32.mrf.mxu0
          %v1596 = vadd.f32 %v1525, %v1595
          %1597 = vmatmul.bf16.gmra.mxu0 %v1504
          %v1598 = vpop.f32.mrf.mxu0
          %v1599 = vadd.f32 %v1525, %v1598
          %v1600 = vpop.f32.mrf.mxu0
          %v1601 = vadd.f32 %v1525, %v1600
          %1602 = vmatmul.bf16.gmra.mxu0 %v1505
          %v1603 = vpop.f32.mrf.mxu0
          %v1604 = vadd.f32 %v1525, %v1603
          %v1605 = vpop.f32.mrf.mxu0
          %v1606 = vadd.f32 %v1525, %v1605
          %1607 = vmatmul.bf16.gmra.mxu0 %v1506
          %v1608 = vpop.f32.mrf.mxu0
          %v1609 = vadd.f32 %v1525, %v1608
          %v1610 = vpop.f32.mrf.mxu0
          %v1611 = vadd.f32 %v1525, %v1610
          %1612 = vmatmul.bf16.gmra.mxu0 %v1507
          %v1613 = vpop.f32.mrf.mxu0
          %v1614 = vadd.f32 %v1525, %v1613
          %v1615 = vpop.f32.mrf.mxu0
          %v1616 = vadd.f32 %v1525, %v1615
          %1617 = vmatmul.bf16.gmra.mxu0 %v1508
          %v1618 = vpop.f32.mrf.mxu0
          %v1619 = vadd.f32 %v1525, %v1618
          %v1620 = vpop.f32.mrf.mxu0
          %v1621 = vadd.f32 %v1525, %v1620
          %1622 = vdwg.mxu0
          %v1623 = vmul.f32 %v1584, 0.33
          %v1624 = vmul.f32 %v1586, 0.33
          %v1625 = vmul.f32 %v1589, 0.33
          %v1626 = vmul.f32 %v1591, 0.33
          %v1627 = vmul.f32 %v1594, 0.33
          %v1628 = vmul.f32 %v1596, 0.33
          %v1629 = vmul.f32 %v1599, 0.33
          %v1630 = vmul.f32 %v1601, 0.33
          %v1631 = vmul.f32 %v1604, 0.33
          %v1632 = vmul.f32 %v1606, 0.33
          %v1633 = vmul.f32 %v1609, 0.33
          %v1634 = vmul.f32 %v1611, 0.33
          %v1635 = vmul.f32 %v1614, 0.33
          %v1636 = vmul.f32 %v1616, 0.33
          %v1637 = vmul.f32 %v1619, 0.33
          %v1638 = vmul.f32 %v1621, 0.33
          %v1639 = vmax.f32 %v1584, %v1623
          %v1640 = vmax.f32 %v1586, %v1624
          %v1641 = vmax.f32 %v1589, %v1625
          %v1642 = vmax.f32 %v1591, %v1626
          %v1643 = vmax.f32 %v1594, %v1627
          %v1644 = vmax.f32 %v1596, %v1628
          %v1645 = vmax.f32 %v1599, %v1629
          %v1646 = vmax.f32 %v1601, %v1630
          %v1647 = vmax.f32 %v1604, %v1631
          %v1648 = vmax.f32 %v1606, %v1632
          %v1649 = vmax.f32 %v1609, %v1633
          %v1650 = vmax.f32 %v1611, %v1634
          %v1651 = vmax.f32 %v1614, %v1635
          %v1652 = vmax.f32 %v1616, %v1636
          %v1653 = vmax.f32 %v1619, %v1637
          %v1654 = vmax.f32 %v1621, %v1638
          %vm1655 = vcmask 523264
          %v1656 = vsel %vm1655, %v1639, 0.0
          %v1657 = vsel %vm1655, %v1640, 0.0
          %v1658 = vadd.f32 %v1656, %v1657
          %v1659 = vsel %vm1655, %v1641, 0.0
          %v1660 = vadd.f32 %v1658, %v1659
          %v1661 = vsel %vm1655, %v1642, 0.0
          %v1662 = vadd.f32 %v1660, %v1661
          %v1663 = vsel %vm1655, %v1643, 0.0
          %v1664 = vadd.f32 %v1662, %v1663
          %v1665 = vsel %vm1655, %v1644, 0.0
          %v1666 = vadd.f32 %v1664, %v1665
          %v1667 = vsel %vm1655, %v1645, 0.0
          %v1668 = vadd.f32 %v1666, %v1667
          %v1669 = vsel %vm1655, %v1646, 0.0
          %v1670 = vadd.f32 %v1668, %v1669
          %v1671 = vsel %vm1655, %v1647, 0.0
          %v1672 = vadd.f32 %v1670, %v1671
          %v1673 = vsel %vm1655, %v1648, 0.0
          %v1674 = vadd.f32 %v1672, %v1673
          %v1675 = vsel %vm1655, %v1649, 0.0
          %v1676 = vadd.f32 %v1674, %v1675
          %v1677 = vsel %vm1655, %v1650, 0.0
          %v1678 = vadd.f32 %v1676, %v1677
          %v1679 = vsel %vm1655, %v1651, 0.0
          %v1680 = vadd.f32 %v1678, %v1679
          %v1681 = vsel %vm1655, %v1652, 0.0
          %v1682 = vadd.f32 %v1680, %v1681
          %v1683 = vsel %vm1655, %v1653, 0.0
          %v1684 = vadd.f32 %v1682, %v1683
          %v1685 = vsel %vm1655, %v1654, 0.0
          %v1686 = vadd.f32 %v1684, %v1685
          %v1687 = vrot.slane %v1686, 4
          %v1688 = vadd.f32 %v1686, %v1687
          %v1689 = vrot.slane %v1688, 2
          %v1690 = vadd.f32 %v1688, %v1689
          %v1691 = vrot.slane %v1690, 1
          %v1692 = vadd.f32 %v1690, %v1691
          %v1693 = vmul.f32 %v1692, %v925
          %v1694 = vmul.f32 %v1639, %v1639
          %v1695 = vmul.f32 %v1640, %v1640
          %v1696 = vmul.f32 %v1641, %v1641
          %v1697 = vmul.f32 %v1642, %v1642
          %v1698 = vmul.f32 %v1643, %v1643
          %v1699 = vmul.f32 %v1644, %v1644
          %v1700 = vmul.f32 %v1645, %v1645
          %v1701 = vmul.f32 %v1646, %v1646
          %v1702 = vmul.f32 %v1647, %v1647
          %v1703 = vmul.f32 %v1648, %v1648
          %v1704 = vmul.f32 %v1649, %v1649
          %v1705 = vmul.f32 %v1650, %v1650
          %v1706 = vmul.f32 %v1651, %v1651
          %v1707 = vmul.f32 %v1652, %v1652
          %v1708 = vmul.f32 %v1653, %v1653
          %v1709 = vmul.f32 %v1654, %v1654
          %v1710 = vsel %vm1655, %v1694, 0.0
          %v1711 = vsel %vm1655, %v1695, 0.0
          %v1712 = vadd.f32 %v1710, %v1711
          %v1713 = vsel %vm1655, %v1696, 0.0
          %v1714 = vadd.f32 %v1712, %v1713
          %v1715 = vsel %vm1655, %v1697, 0.0
          %v1716 = vadd.f32 %v1714, %v1715
          %v1717 = vsel %vm1655, %v1698, 0.0
          %v1718 = vadd.f32 %v1716, %v1717
          %v1719 = vsel %vm1655, %v1699, 0.0
          %v1720 = vadd.f32 %v1718, %v1719
          %v1721 = vsel %vm1655, %v1700, 0.0
          %v1722 = vadd.f32 %v1720, %v1721
          %v1723 = vsel %vm1655, %v1701, 0.0
          %v1724 = vadd.f32 %v1722, %v1723
          %v1725 = vsel %vm1655, %v1702, 0.0
          %v1726 = vadd.f32 %v1724, %v1725
          %v1727 = vsel %vm1655, %v1703, 0.0
          %v1728 = vadd.f32 %v1726, %v1727
          %v1729 = vsel %vm1655, %v1704, 0.0
          %v1730 = vadd.f32 %v1728, %v1729
          %v1731 = vsel %vm1655, %v1705, 0.0
          %v1732 = vadd.f32 %v1730, %v1731
          %v1733 = vsel %vm1655, %v1706, 0.0
          %v1734 = vadd.f32 %v1732, %v1733
          %v1735 = vsel %vm1655, %v1707, 0.0
          %v1736 = vadd.f32 %v1734, %v1735
          %v1737 = vsel %vm1655, %v1708, 0.0
          %v1738 = vadd.f32 %v1736, %v1737
          %v1739 = vsel %vm1655, %v1709, 0.0
          %v1740 = vadd.f32 %v1738, %v1739
          %v1741 = vrot.slane %v1740, 4
          %v1742 = vadd.f32 %v1740, %v1741
          %v1743 = vrot.slane %v1742, 2
          %v1744 = vadd.f32 %v1742, %v1743
          %v1745 = vrot.slane %v1744, 1
          %v1746 = vadd.f32 %v1744, %v1745
          %v1747 = vmul.f32 %v1746, %v925
          %v1748 = vmul.f32 %v1693, %v1693
          %v1749 = vsub.f32 %v1747, %v1748
          %v1750 = vmax.f32 %v1749, 0.0
          %v1751 = vadd.f32 %v1750, 1e-05
          %v1752 = vrsqrt.pop %v1751
          %v1753 = vmul.f32 %v1752, %v1751
          %v1754 = vmul.f32 %v1753, %v1752
          %v1755 = vmul.f32 0.5, %v1754
          %v1756 = vsub.f32 1.5, %v1755
          %v1757 = vmul.f32 %v1752, %v1756
          %vm1758 = vweird.f32 %v1751
          %vm1759 = vweird.f32 %v1752
          %vm1760 = vmor %vm1758, %vm1759
          %v1761 = vsel %vm1760, %v1752, %v1757
          %v1762 = vmul.f32 %v744, %v1761
          %v1763 = vmul.f32 %v1693, %v1762
          %v1765 = vrot.slane %v1763, 7
          %v1767 = vsub.f32 %v744, %v1765
          %v1768 = vperm.slane %v1762, 1
          %v1769 = vmul.f32 %v1639, %v1768
          %v1770 = vmul.f32 %v1640, %v1768
          %v1771 = vmul.f32 %v1641, %v1768
          %v1772 = vmul.f32 %v1642, %v1768
          %v1773 = vmul.f32 %v1643, %v1768
          %v1774 = vmul.f32 %v1644, %v1768
          %v1775 = vmul.f32 %v1645, %v1768
          %v1776 = vmul.f32 %v1646, %v1768
          %v1777 = vmul.f32 %v1647, %v1768
          %v1778 = vmul.f32 %v1648, %v1768
          %v1779 = vmul.f32 %v1649, %v1768
          %v1780 = vmul.f32 %v1650, %v1768
          %v1781 = vmul.f32 %v1651, %v1768
          %v1782 = vmul.f32 %v1652, %v1768
          %v1783 = vmul.f32 %v1653, %v1768
          %v1784 = vmul.f32 %v1654, %v1768
          %v1785 = vperm.slane %v1767, 2
          %v1786 = vadd.f32 %v1769, %v1785
          %v1787 = vadd.f32 %v1770, %v1785
          %v1788 = vadd.f32 %v1771, %v1785
          %v1789 = vadd.f32 %v1772, %v1785
          %v1790 = vadd.f32 %v1773, %v1785
          %v1791 = vadd.f32 %v1774, %v1785
          %v1792 = vadd.f32 %v1775, %v1785
          %v1793 = vadd.f32 %v1776, %v1785
          %v1794 = vadd.f32 %v1777, %v1785
          %v1795 = vadd.f32 %v1778, %v1785
          %v1796 = vadd.f32 %v1779, %v1785
          %v1797 = vadd.f32 %v1780, %v1785
          %v1798 = vadd.f32 %v1781, %v1785
          %v1799 = vadd.f32 %v1782, %v1785
          %v1800 = vadd.f32 %v1783, %v1785
          %v1801 = vadd.f32 %v1784, %v1785
          %v1802 = vpack.c.bf16 %v1787, %v1786
          %v1803 = vpack.c.bf16 %v1789, %v1788
          %v1804 = vpack.c.bf16 %v1791, %v1790
          %v1805 = vpack.c.bf16 %v1793, %v1792
          %v1806 = vpack.c.bf16 %v1795, %v1794
          %v1807 = vpack.c.bf16 %v1797, %v1796
          %v1808 = vpack.c.bf16 %v1799, %v1798
          %v1809 = vpack.c.bf16 %v1801, %v1800
          %v1810 = vld [vmem:[%s4] sm:$0xf]
          %v1811 = vld [vmem:[%s4 + $0x4] sm:$0xf]
          %v1812 = vld [vmem:[%s4 + $0x8] sm:$0xf]
          %v1813 = vld [vmem:[%s4 + $0xc] sm:$0xf]
          %v1814 = vld [vmem:[%s4 + $0x10] sm:$0xf]
          %v1815 = vld [vmem:[%s4 + $0x14] sm:$0xf]
          %v1816 = vld [vmem:[%s4 + $0x18] sm:$0xf]
          %v1817 = vld [vmem:[%s4 + $0x1c] sm:$0xf]
          %v1818 = vperm.slane %v745, 0
          %v1827 = vunpack.c.l.b16 %v1810
          %v1828 = vunpack.c.l.b16 %v1811
          %v1829 = vunpack.c.l.b16 %v1812
          %v1830 = vunpack.c.l.b16 %v1813
          %v1831 = vunpack.c.l.b16 %v1814
          %v1832 = vunpack.c.l.b16 %v1815
          %v1833 = vunpack.c.l.b16 %v1816
          %v1834 = vunpack.c.l.b16 %v1817
          %v1835 = vpack.c.b16 %v1828, %v1827
          %v1836 = vpack.c.b16 %v1830, %v1829
          %v1837 = vpack.c.b16 %v1832, %v1831
          %v1838 = vpack.c.b16 %v1834, %v1833
          %v1844 = vsel %vm1655, %v1802, 0
          %v1847 = vsel %vm1655, %v1803, 0
          %v1850 = vsel %vm1655, %v1804, 0
          %v1853 = vsel %vm1655, %v1805, 0
          %v1856 = vsel %vm1655, %v1806, 0
          %v1859 = vsel %vm1655, %v1807, 0
          %v1862 = vsel %vm1655, %v1808, 0
          %v1865 = vsel %vm1655, %v1809, 0
          %1867 = vmatpush.bf16.msra.mxu0 0
          %1868 = vmatpush.bf16.msra.mxu0 0
          %1869 = vmatpush.bf16.msra.mxu0 0
          %1870 = vmatpush.bf16.msra.mxu0 0
          %1871 = vmatpush.bf16.msra.mxu0 %v1838
          %1872 = vmatpush.bf16.msra.mxu0 %v1837
          %1873 = vmatpush.bf16.msra.mxu0 %v1836
          %1874 = vmatpush.bf16.msra.mxu0 %v1835
          %1875 = vmatmul.bf16.gmra.mxu0 %v1844
          %v1876 = vpop.f32.mrf.mxu0
          %v1877 = vadd.f32 %v1818, %v1876
          %v1878 = vpop.f32.mrf.mxu0
          %v1879 = vadd.f32 %v1818, %v1878
          %1880 = vmatmul.bf16.gmra.mxu0 %v1847
          %v1881 = vpop.f32.mrf.mxu0
          %v1882 = vadd.f32 %v1818, %v1881
          %v1883 = vpop.f32.mrf.mxu0
          %v1884 = vadd.f32 %v1818, %v1883
          %1885 = vmatmul.bf16.gmra.mxu0 %v1850
          %v1886 = vpop.f32.mrf.mxu0
          %v1887 = vadd.f32 %v1818, %v1886
          %v1888 = vpop.f32.mrf.mxu0
          %v1889 = vadd.f32 %v1818, %v1888
          %1890 = vmatmul.bf16.gmra.mxu0 %v1853
          %v1891 = vpop.f32.mrf.mxu0
          %v1892 = vadd.f32 %v1818, %v1891
          %v1893 = vpop.f32.mrf.mxu0
          %v1894 = vadd.f32 %v1818, %v1893
          %1895 = vmatmul.bf16.gmra.mxu0 %v1856
          %v1896 = vpop.f32.mrf.mxu0
          %v1897 = vadd.f32 %v1818, %v1896
          %v1898 = vpop.f32.mrf.mxu0
          %v1899 = vadd.f32 %v1818, %v1898
          %1900 = vmatmul.bf16.gmra.mxu0 %v1859
          %v1901 = vpop.f32.mrf.mxu0
          %v1902 = vadd.f32 %v1818, %v1901
          %v1903 = vpop.f32.mrf.mxu0
          %v1904 = vadd.f32 %v1818, %v1903
          %1905 = vmatmul.bf16.gmra.mxu0 %v1862
          %v1906 = vpop.f32.mrf.mxu0
          %v1907 = vadd.f32 %v1818, %v1906
          %v1908 = vpop.f32.mrf.mxu0
          %v1909 = vadd.f32 %v1818, %v1908
          %1910 = vmatmul.bf16.gmra.mxu0 %v1865
          %v1911 = vpop.f32.mrf.mxu0
          %v1912 = vadd.f32 %v1818, %v1911
          %v1913 = vpop.f32.mrf.mxu0
          %v1914 = vadd.f32 %v1818, %v1913
          %1915 = vdwg.mxu0
          %v1916 = vmul.f32 %v1877, 0.33
          %v1917 = vmul.f32 %v1879, 0.33
          %v1918 = vmul.f32 %v1882, 0.33
          %v1919 = vmul.f32 %v1884, 0.33
          %v1920 = vmul.f32 %v1887, 0.33
          %v1921 = vmul.f32 %v1889, 0.33
          %v1922 = vmul.f32 %v1892, 0.33
          %v1923 = vmul.f32 %v1894, 0.33
          %v1924 = vmul.f32 %v1897, 0.33
          %v1925 = vmul.f32 %v1899, 0.33
          %v1926 = vmul.f32 %v1902, 0.33
          %v1927 = vmul.f32 %v1904, 0.33
          %v1928 = vmul.f32 %v1907, 0.33
          %v1929 = vmul.f32 %v1909, 0.33
          %v1930 = vmul.f32 %v1912, 0.33
          %v1931 = vmul.f32 %v1914, 0.33
          %v1932 = vmax.f32 %v1877, %v1916
          %v1933 = vmax.f32 %v1879, %v1917
          %v1934 = vmax.f32 %v1882, %v1918
          %v1935 = vmax.f32 %v1884, %v1919
          %v1936 = vmax.f32 %v1887, %v1920
          %v1937 = vmax.f32 %v1889, %v1921
          %v1938 = vmax.f32 %v1892, %v1922
          %v1939 = vmax.f32 %v1894, %v1923
          %v1940 = vmax.f32 %v1897, %v1924
          %v1941 = vmax.f32 %v1899, %v1925
          %v1942 = vmax.f32 %v1902, %v1926
          %v1943 = vmax.f32 %v1904, %v1927
          %v1944 = vmax.f32 %v1907, %v1928
          %v1945 = vmax.f32 %v1909, %v1929
          %v1946 = vmax.f32 %v1912, %v1930
          %v1947 = vmax.f32 %v1914, %v1931
          %vm1948 = vcmask 261120
          %v1949 = vsel %vm1948, %v1932, 0.0
          %v1950 = vsel %vm1948, %v1933, 0.0
          %v1951 = vadd.f32 %v1949, %v1950
          %v1952 = vsel %vm1948, %v1934, 0.0
          %v1953 = vadd.f32 %v1951, %v1952
          %v1954 = vsel %vm1948, %v1935, 0.0
          %v1955 = vadd.f32 %v1953, %v1954
          %v1956 = vsel %vm1948, %v1936, 0.0
          %v1957 = vadd.f32 %v1955, %v1956
          %v1958 = vsel %vm1948, %v1937, 0.0
          %v1959 = vadd.f32 %v1957, %v1958
          %v1960 = vsel %vm1948, %v1938, 0.0
          %v1961 = vadd.f32 %v1959, %v1960
          %v1962 = vsel %vm1948, %v1939, 0.0
          %v1963 = vadd.f32 %v1961, %v1962
          %v1964 = vsel %vm1948, %v1940, 0.0
          %v1965 = vadd.f32 %v1963, %v1964
          %v1966 = vsel %vm1948, %v1941, 0.0
          %v1967 = vadd.f32 %v1965, %v1966
          %v1968 = vsel %vm1948, %v1942, 0.0
          %v1969 = vadd.f32 %v1967, %v1968
          %v1970 = vsel %vm1948, %v1943, 0.0
          %v1971 = vadd.f32 %v1969, %v1970
          %v1972 = vsel %vm1948, %v1944, 0.0
          %v1973 = vadd.f32 %v1971, %v1972
          %v1974 = vsel %vm1948, %v1945, 0.0
          %v1975 = vadd.f32 %v1973, %v1974
          %v1976 = vsel %vm1948, %v1946, 0.0
          %v1977 = vadd.f32 %v1975, %v1976
          %v1978 = vsel %vm1948, %v1947, 0.0
          %v1979 = vadd.f32 %v1977, %v1978
          %v1980 = vrot.slane %v1979, 4
          %v1981 = vadd.f32 %v1979, %v1980
          %v1982 = vrot.slane %v1981, 2
          %v1983 = vadd.f32 %v1981, %v1982
          %v1984 = vrot.slane %v1983, 1
          %v1985 = vadd.f32 %v1983, %v1984
          %v1986 = vmul.f32 %v1985, %v925
          %v1987 = vmul.f32 %v1932, %v1932
          %v1988 = vmul.f32 %v1933, %v1933
          %v1989 = vmul.f32 %v1934, %v1934
          %v1990 = vmul.f32 %v1935, %v1935
          %v1991 = vmul.f32 %v1936, %v1936
          %v1992 = vmul.f32 %v1937, %v1937
          %v1993 = vmul.f32 %v1938, %v1938
          %v1994 = vmul.f32 %v1939, %v1939
          %v1995 = vmul.f32 %v1940, %v1940
          %v1996 = vmul.f32 %v1941, %v1941
          %v1997 = vmul.f32 %v1942, %v1942
          %v1998 = vmul.f32 %v1943, %v1943
          %v1999 = vmul.f32 %v1944, %v1944
          %v2000 = vmul.f32 %v1945, %v1945
          %v2001 = vmul.f32 %v1946, %v1946
          %v2002 = vmul.f32 %v1947, %v1947
          %v2003 = vsel %vm1948, %v1987, 0.0
          %v2004 = vsel %vm1948, %v1988, 0.0
          %v2005 = vadd.f32 %v2003, %v2004
          %v2006 = vsel %vm1948, %v1989, 0.0
          %v2007 = vadd.f32 %v2005, %v2006
          %v2008 = vsel %vm1948, %v1990, 0.0
          %v2009 = vadd.f32 %v2007, %v2008
          %v2010 = vsel %vm1948, %v1991, 0.0
          %v2011 = vadd.f32 %v2009, %v2010
          %v2012 = vsel %vm1948, %v1992, 0.0
          %v2013 = vadd.f32 %v2011, %v2012
          %v2014 = vsel %vm1948, %v1993, 0.0
          %v2015 = vadd.f32 %v2013, %v2014
          %v2016 = vsel %vm1948, %v1994, 0.0
          %v2017 = vadd.f32 %v2015, %v2016
          %v2018 = vsel %vm1948, %v1995, 0.0
          %v2019 = vadd.f32 %v2017, %v2018
          %v2020 = vsel %vm1948, %v1996, 0.0
          %v2021 = vadd.f32 %v2019, %v2020
          %v2022 = vsel %vm1948, %v1997, 0.0
          %v2023 = vadd.f32 %v2021, %v2022
          %v2024 = vsel %vm1948, %v1998, 0.0
          %v2025 = vadd.f32 %v2023, %v2024
          %v2026 = vsel %vm1948, %v1999, 0.0
          %v2027 = vadd.f32 %v2025, %v2026
          %v2028 = vsel %vm1948, %v2000, 0.0
          %v2029 = vadd.f32 %v2027, %v2028
          %v2030 = vsel %vm1948, %v2001, 0.0
          %v2031 = vadd.f32 %v2029, %v2030
          %v2032 = vsel %vm1948, %v2002, 0.0
          %v2033 = vadd.f32 %v2031, %v2032
          %v2034 = vrot.slane %v2033, 4
          %v2035 = vadd.f32 %v2033, %v2034
          %v2036 = vrot.slane %v2035, 2
          %v2037 = vadd.f32 %v2035, %v2036
          %v2038 = vrot.slane %v2037, 1
          %v2039 = vadd.f32 %v2037, %v2038
          %v2040 = vmul.f32 %v2039, %v925
          %v2041 = vmul.f32 %v1986, %v1986
          %v2042 = vsub.f32 %v2040, %v2041
          %v2043 = vmax.f32 %v2042, 0.0
          %v2044 = vadd.f32 %v2043, 1e-05
          %v2045 = vrsqrt.pop %v2044
          %v2046 = vmul.f32 %v2045, %v2044
          %v2047 = vmul.f32 %v2046, %v2045
          %v2048 = vmul.f32 0.5, %v2047
          %v2049 = vsub.f32 1.5, %v2048
          %v2050 = vmul.f32 %v2045, %v2049
          %vm2051 = vweird.f32 %v2044
          %vm2052 = vweird.f32 %v2045
          %vm2053 = vmor %vm2051, %vm2052
          %v2054 = vsel %vm2053, %v2045, %v2050
          %v2055 = vmul.f32 %v745, %v2054
          %v2056 = vmul.f32 %v1986, %v2055
          %v2058 = vrot.slane %v2056, 7
          %v2060 = vsub.f32 %v745, %v2058
          %v2061 = vperm.slane %v2055, 1
          %v2062 = vmul.f32 %v1932, %v2061
          %v2063 = vmul.f32 %v1933, %v2061
          %v2064 = vmul.f32 %v1934, %v2061
          %v2065 = vmul.f32 %v1935, %v2061
          %v2066 = vmul.f32 %v1936, %v2061
          %v2067 = vmul.f32 %v1937, %v2061
          %v2068 = vmul.f32 %v1938, %v2061
          %v2069 = vmul.f32 %v1939, %v2061
          %v2070 = vmul.f32 %v1940, %v2061
          %v2071 = vmul.f32 %v1941, %v2061
          %v2072 = vmul.f32 %v1942, %v2061
          %v2073 = vmul.f32 %v1943, %v2061
          %v2074 = vmul.f32 %v1944, %v2061
          %v2075 = vmul.f32 %v1945, %v2061
          %v2076 = vmul.f32 %v1946, %v2061
          %v2077 = vmul.f32 %v1947, %v2061
          %v2078 = vperm.slane %v2060, 2
          %v2079 = vadd.f32 %v2062, %v2078
          %v2080 = vadd.f32 %v2063, %v2078
          %v2081 = vadd.f32 %v2064, %v2078
          %v2082 = vadd.f32 %v2065, %v2078
          %v2083 = vadd.f32 %v2066, %v2078
          %v2084 = vadd.f32 %v2067, %v2078
          %v2085 = vadd.f32 %v2068, %v2078
          %v2086 = vadd.f32 %v2069, %v2078
          %v2087 = vadd.f32 %v2070, %v2078
          %v2088 = vadd.f32 %v2071, %v2078
          %v2089 = vadd.f32 %v2072, %v2078
          %v2090 = vadd.f32 %v2073, %v2078
          %v2091 = vadd.f32 %v2074, %v2078
          %v2092 = vadd.f32 %v2075, %v2078
          %v2093 = vadd.f32 %v2076, %v2078
          %v2094 = vadd.f32 %v2077, %v2078
          %v2095 = vpack.c.bf16 %v2080, %v2079
          %v2096 = vpack.c.bf16 %v2082, %v2081
          %v2097 = vpack.c.bf16 %v2084, %v2083
          %v2098 = vpack.c.bf16 %v2086, %v2085
          %v2099 = vpack.c.bf16 %v2088, %v2087
          %v2100 = vpack.c.bf16 %v2090, %v2089
          %v2101 = vpack.c.bf16 %v2092, %v2091
          %v2102 = vpack.c.bf16 %v2094, %v2093
          %v2103 = vld [vmem:[%s5] sm:$0xf]
          %v2104 = vld [vmem:[%s5 + $0x4] sm:$0xf]
          %v2105 = vld [vmem:[%s5 + $0x8] sm:$0xf]
          %v2106 = vld [vmem:[%s5 + $0xc] sm:$0xf]
          %v2107 = vperm.slane %v746, 0
          %v2112 = vunpack.c.l.b16 %v2103
          %v2113 = vunpack.c.l.b16 %v2104
          %v2114 = vunpack.c.l.b16 %v2105
          %v2115 = vunpack.c.l.b16 %v2106
          %v2116 = vpack.c.b16 %v2113, %v2112
          %v2117 = vpack.c.b16 %v2115, %v2114
          %v2121 = vsel %vm1948, %v2095, 0
          %v2124 = vsel %vm1948, %v2096, 0
          %v2127 = vsel %vm1948, %v2097, 0
          %v2130 = vsel %vm1948, %v2098, 0
          %v2133 = vsel %vm1948, %v2099, 0
          %v2136 = vsel %vm1948, %v2100, 0
          %v2139 = vsel %vm1948, %v2101, 0
          %v2142 = vsel %vm1948, %v2102, 0
          %2144 = vmatpush.bf16.msra.mxu0 0
          %2145 = vmatpush.bf16.msra.mxu0 0
          %2146 = vmatpush.bf16.msra.mxu0 0
          %2147 = vmatpush.bf16.msra.mxu0 0
          %2148 = vmatpush.bf16.msra.mxu0 0
          %2149 = vmatpush.bf16.msra.mxu0 0
          %2150 = vmatpush.bf16.msra.mxu0 %v2117
          %2151 = vmatpush.bf16.msra.mxu0 %v2116
          %2152 = vmatmul.bf16.gmra.mxu0 %v2121
          %v2153 = vpop.f32.mrf.mxu0
          %v2154 = vadd.f32 %v2107, %v2153
          %v2155 = vpop.f32.mrf.mxu0
          %v2156 = vadd.f32 %v2107, %v2155
          %2157 = vmatmul.bf16.gmra.mxu0 %v2124
          %v2158 = vpop.f32.mrf.mxu0
          %v2159 = vadd.f32 %v2107, %v2158
          %v2160 = vpop.f32.mrf.mxu0
          %v2161 = vadd.f32 %v2107, %v2160
          %2162 = vmatmul.bf16.gmra.mxu0 %v2127
          %v2163 = vpop.f32.mrf.mxu0
          %v2164 = vadd.f32 %v2107, %v2163
          %v2165 = vpop.f32.mrf.mxu0
          %v2166 = vadd.f32 %v2107, %v2165
          %2167 = vmatmul.bf16.gmra.mxu0 %v2130
          %v2168 = vpop.f32.mrf.mxu0
          %v2169 = vadd.f32 %v2107, %v2168
          %v2170 = vpop.f32.mrf.mxu0
          %v2171 = vadd.f32 %v2107, %v2170
          %2172 = vmatmul.bf16.gmra.mxu0 %v2133
          %v2173 = vpop.f32.mrf.mxu0
          %v2174 = vadd.f32 %v2107, %v2173
          %v2175 = vpop.f32.mrf.mxu0
          %v2176 = vadd.f32 %v2107, %v2175
          %2177 = vmatmul.bf16.gmra.mxu0 %v2136
          %v2178 = vpop.f32.mrf.mxu0
          %v2179 = vadd.f32 %v2107, %v2178
          %v2180 = vpop.f32.mrf.mxu0
          %v2181 = vadd.f32 %v2107, %v2180
          %2182 = vmatmul.bf16.gmra.mxu0 %v2139
          %v2183 = vpop.f32.mrf.mxu0
          %v2184 = vadd.f32 %v2107, %v2183
          %v2185 = vpop.f32.mrf.mxu0
          %v2186 = vadd.f32 %v2107, %v2185
          %2187 = vmatmul.bf16.gmra.mxu0 %v2142
          %v2188 = vpop.f32.mrf.mxu0
          %v2189 = vadd.f32 %v2107, %v2188
          %v2190 = vpop.f32.mrf.mxu0
          %v2191 = vadd.f32 %v2107, %v2190
          %2192 = vdwg.mxu0
          %2193 = vst [vmem:[#allocation9] sm:$0xff] %v2154
          %2194 = vst [vmem:[#allocation9 + $0x8] sm:$0xff] %v2156
          %2195 = vst [vmem:[#allocation9 + $0x10] sm:$0xff] %v2159
          %2196 = vst [vmem:[#allocation9 + $0x18] sm:$0xff] %v2161
          %2197 = vst [vmem:[#allocation9 + $0x20] sm:$0xff] %v2164
          %2198 = vst [vmem:[#allocation9 + $0x28] sm:$0xff] %v2166
          %2199 = vst [vmem:[#allocation9 + $0x30] sm:$0xff] %v2169
          %2200 = vst [vmem:[#allocation9 + $0x38] sm:$0xff] %v2171
          %2201 = vst [vmem:[#allocation9 + $0x40] sm:$0xff] %v2174
          %2202 = vst [vmem:[#allocation9 + $0x48] sm:$0xff] %v2176
          %2203 = vst [vmem:[#allocation9 + $0x50] sm:$0xff] %v2179
          %2204 = vst [vmem:[#allocation9 + $0x58] sm:$0xff] %v2181
          %2205 = vst [vmem:[#allocation9 + $0x60] sm:$0xff] %v2184
          %2206 = vst [vmem:[#allocation9 + $0x68] sm:$0xff] %v2186
          %2207 = vst [vmem:[#allocation9 + $0x70] sm:$0xff] %v2189
          %2208 = vst [vmem:[#allocation9 + $0x78] sm:$0xff] %v2191
        $region68: #{tpu_custom_call.1} parent=47 // pred_fallthru
          _
        // Predicated region
        $region69: #{tpu_custom_call.1} parent=47 // pred_check
          %p2209 = pneg %p195
        $region70: #{tpu_custom_call.1} parent=47 // pred_check_branch
          %2211 = sbr.rel (%p2209) target = $region72
        $region71: #{tpu_custom_call.1} parent=47 // pred_region
          %2213 = vsyncadd [#allocation5], 0
          %s2214 = sshll.u32 [#allocation9], 4
          %s2215 = int_to_ptr.vmem [resolvable:$true] %s2214
          %s2216 = sshll.u32 %s7, 4
          %s2217 = int_to_ptr.hbm [resolvable:$true] %s2216
          %2222 = dma.vmem_to_hbm [thread:$0]  %s2215, 2048, %s2217, [#allocation5], 128, 128, 8
        $region72: #{tpu_custom_call.1} parent=47 // pred_fallthru
          _
        // Predicated region
        $region73: #{tpu_custom_call.1} parent=47 // pred_check
          %p2223 = pneg %p195
        $region74: #{tpu_custom_call.1} parent=47 // pred_check_branch
          %2225 = sbr.rel (%p2223) target = $region76
        $region75: #{tpu_custom_call.1} parent=47 // pred_region
          %2227 = dma.done [#allocation5], 2048
        $region76: #{tpu_custom_call.1} parent=47 // pred_fallthru
          _
      $region48: #{tpu_custom_call.1} parent=5 // pred_fallthru
        _
      %p2228 = scmp.le.s32.totalorder 2, %s20
      // Predicated region
      $region77: #{tpu_custom_call.1} parent=5 // pred_check
        %p2229 = pneg %p2228
      $region78: #{tpu_custom_call.1} parent=5 // pred_check_branch
        %2231 = sbr.rel (%p2229) target = $region80
      $region79: #{tpu_custom_call.1} parent=5 // pred_region
        %s2232 = ssub.s32 %s20, 2
      $region80: #{tpu_custom_call.1} parent=5 // pred_fallthru
        _
    $region6: #{tpu_custom_call.1} parent=1 // loop_footer
      %s24 = sadd.s32 1, %s20
    $region7: #{tpu_custom_call.1} parent=1 // loop_footer_branch
      %19 = sbr.rel target = $region3
    $region8: #{tpu_custom_call.1} parent=1 // loop_exit
      _
    %2233 = vsyncpa [#allocation4], 1
    %s2234 = scalar_lea.sflag [#allocation4], 1
    %2235 = vsyncpa %s2234, 1
    %2236 = vsyncpa [#allocation7], 1
    %s2237 = scalar_lea.sflag [#allocation7], 1
    %2238 = vsyncpa %s2237, 1
    %2239 = vsyncpa [#allocation5], 1
    %s2240 = scalar_lea.sflag [#allocation5], 1
    %2241 = vsyncpa %s2240, 1

</llo_original>
